<compile_context>
chip_gen: v5e
topology: v5e:2x2
jax: 0.10.0
libtpu: 0.0.40
codegen_flags: <defaults>
</compile_context>

<pallas_src>
import jax
import jax.numpy as jnp
from jax import lax
from jax.experimental import pallas as pl
from jax.experimental.pallas import tpu as pltpu


# ----------------------------------------------------------------------------
# Fused kernel: all LSTM layers + classifier in one pallas_call.
# ----------------------------------------------------------------------------
def _make_fused_kernel(num_layers, T, B, H, C):
    """Builds the fused (LSTM stack + classifier) kernel body."""

    def kernel(*refs):
        # inputs : x_flat (T*B, I), then (w_ih^T, w_hh^T, bias) per layer,
        #          then cls_w^T (H, C), cls_b (1, C)
        # outputs: h_out (B, T, H), y_out (B, T, C)
        # scratch: hseq (T*B, H) f32
        idx = 0
        x_ref = refs[idx]; idx += 1
        layer_refs = []
        for _ in range(num_layers):
            layer_refs.append((refs[idx], refs[idx + 1], refs[idx + 2]))
            idx += 3
        cls_w_ref = refs[idx]; cls_b_ref = refs[idx + 1]; idx += 2
        h_out_ref = refs[idx]; y_out_ref = refs[idx + 1]; idx += 2
        hseq_scr = refs[idx]

        x_flat = x_ref[...]                                    # (T*B, I) f32
        for layer_idx, (wih_ref, whh_ref, b_ref) in enumerate(layer_refs):
            wih = wih_ref[...]                                 # (I_l, 4H) bf16
            whh = whh_ref[...]                                 # (H, 4H)  bf16
            bias = b_ref[...]                                  # (1, 4H)  f32

            # Hoisted input projection: ONE MXU matmul over all timesteps.
            gx = jnp.dot(x_flat.astype(jnp.bfloat16), wih,
                         preferred_element_type=jnp.float32) + bias  # (T*B, 4H)

            h = jnp.zeros((B, H), jnp.float32)
            c = jnp.zeros((B, H), jnp.float32)
            is_last = layer_idx == num_layers - 1
            for t in range(T):                                 # static unroll
                g = gx[t * B:(t + 1) * B, :] + jnp.dot(
                    h.astype(jnp.bfloat16), whh,
                    preferred_element_type=jnp.float32)        # (B, 4H)
                # PyTorch gate order: i, f, g, o.  Gate math kept in f32.
                i_g = jax.nn.sigmoid(g[:, 0 * H:1 * H])
                f_g = jax.nn.sigmoid(g[:, 1 * H:2 * H])
                g_g = jnp.tanh(g[:, 2 * H:3 * H])
                o_g = jax.nn.sigmoid(g[:, 3 * H:4 * H])
                c = f_g * c + i_g * g_g
                h = o_g * jnp.tanh(c)
                hseq_scr[t * B:(t + 1) * B, :] = h             # next-layer input
                if is_last:
                    # Write hidden states directly in (B, T, H) layout.
                    h_out_ref[:, t, :] = h.astype(h_out_ref.dtype)
            x_flat = hseq_scr[...]                             # (T*B, H)

        # Fused classifier over the whole (T*B, H) slab — one MXU matmul.
        logits = jnp.dot(x_flat.astype(jnp.bfloat16), cls_w_ref[...],
                         preferred_element_type=jnp.float32) + cls_b_ref[...]
        for t in range(T):
            # Write logits directly in (B, T, C) layout.
            y_out_ref[:, t, :] = logits[t * B:(t + 1) * B, :].astype(y_out_ref.dtype)

    return kernel


# ----------------------------------------------------------------------------
# Full forward pass (wrapper).
# ----------------------------------------------------------------------------
def lstm_classifier_all_times(x, params):
    # x: (B, 1, I, T) -> squeeze -> (B, I, T) -> single (2,0,1) permute ->
    # time-major (T, B, I) -> flatten to (T*B, I).
    B, _, I, T = x.shape
    x_flat = jnp.transpose(jnp.squeeze(x, axis=1), (2, 0, 1)).reshape(T * B, I)

    layers = params["lstm"]
    num_layers = len(layers)
    H = layers[0]["w_hh"].shape[1]
    C = params["cls_w"].shape[0]

    inputs = [x_flat.astype(jnp.float32)]
    for layer in layers:
        inputs.append(layer["w_ih"].T.astype(jnp.bfloat16))               # (I_l, 4H)
        inputs.append(layer["w_hh"].T.astype(jnp.bfloat16))               # (H, 4H)
        inputs.append((layer["b_ih"] + layer["b_hh"]).reshape(1, 4 * H))  # (1, 4H) f32
    inputs.append(params["cls_w"].T.astype(jnp.bfloat16))                 # (H, C)
    inputs.append(params["cls_b"].reshape(1, C))                          # (1, C) f32

    # TODO(synk): nn.LSTM inter-layer dropout is training-only; this is the
    # inference forward (no dropout applied), matching module.eval() semantics.
    kernel = _make_fused_kernel(num_layers, T, B, H, C)
    h_out, y_out = pl.pallas_call(
        kernel,
        out_shape=(jax.ShapeDtypeStruct((B, T, H), jnp.float32),
                   jax.ShapeDtypeStruct((B, T, C), jnp.float32)),
        scratch_shapes=[pltpu.VMEM((T * B, H), jnp.float32)],
    )(*inputs)
    return h_out, y_out


# ----------------------------------------------------------------------------
# Pure-JAX reference (lax.scan), matched to the kernel's bf16-operand matmuls.
# ----------------------------------------------------------------------------
def _reference(x, params):
    x = jnp.squeeze(x, axis=1)
    x_tm = jnp.transpose(x, (2, 0, 1))                  # (T, B, I)

    def run_layer(x_seq, layer):
        w_ih_t = layer["w_ih"].T.astype(jnp.bfloat16)
        w_hh_t = layer["w_hh"].T.astype(jnp.bfloat16)
        b = layer["b_ih"] + layer["b_hh"]
        H = layer["w_hh"].shape[1]
        B = x_seq.shape[1]

        def step(carry, x_t):
            h, c = carry
            g = (jnp.dot(x_t.astype(jnp.bfloat16), w_ih_t,
                         preferred_element_type=jnp.float32)
                 + jnp.dot(h.astype(jnp.bfloat16), w_hh_t,
                           preferred_element_type=jnp.float32)
                 + b)
            i = jax.nn.sigmoid(g[:, :H])
            f = jax.nn.sigmoid(g[:, H:2 * H])
            gg = jnp.tanh(g[:, 2 * H:3 * H])
            o = jax.nn.sigmoid(g[:, 3 * H:])
            c = f * c + i * gg
            h = o * jnp.tanh(c)
            return (h, c), h

        init = (jnp.zeros((B, H), jnp.float32), jnp.zeros((B, H), jnp.float32))
        _, hs = lax.scan(step, init, x_seq)
        return hs

    h_tm = x_tm
    for layer in params["lstm"]:
        h_tm = run_layer(h_tm, layer)

    T, B, H = h_tm.shape
    logits = (jnp.dot(h_tm.reshape(T * B, H).astype(jnp.bfloat16),
                      params["cls_w"].T.astype(jnp.bfloat16),
                      preferred_element_type=jnp.float32)
              + params["cls_b"]).reshape(T, B, -1)
    return jnp.transpose(h_tm, (1, 0, 2)), jnp.transpose(logits, (1, 0, 2))


# ----------------------------------------------------------------------------
# Deterministic parameter init (PyTorch-style uniform(-1/sqrt(H), 1/sqrt(H))).
# ----------------------------------------------------------------------------
def init_params(key, input_size, hidden_size, num_layers, classes_num):
    k = 1.0 / jnp.sqrt(hidden_size)
    layers = []
    for layer_idx in range(num_layers):
        in_dim = input_size if layer_idx == 0 else hidden_size
        key, k1, k2, k3, k4 = jax.random.split(key, 5)
        layers.append({
            "w_ih": jax.random.uniform(k1, (4 * hidden_size, in_dim),
                                       jnp.float32, -k, k),
            "w_hh": jax.random.uniform(k2, (4 * hidden_size, hidden_size),
                                       jnp.float32, -k, k),
            "b_ih": jax.random.uniform(k3, (4 * hidden_size,), jnp.float32, -k, k),
            "b_hh": jax.random.uniform(k4, (4 * hidden_size,), jnp.float32, -k, k),
        })
    key, kc1, kc2 = jax.random.split(key, 3)
    params = {
        "lstm": layers,
        "cls_w": jax.random.uniform(kc1, (classes_num, hidden_size),
                                    jnp.float32, -k, k),
        "cls_b": jax.random.uniform(kc2, (classes_num,), jnp.float32, -k, k),
    }
    return params, key


if __name__ == "__main__":
    B, INPUT, T, HIDDEN, LAYERS, CLASSES = 2, 16, 8, 32, 2, 8

    key = jax.random.PRNGKey(0)
    params, key = init_params(key, INPUT, HIDDEN, LAYERS, CLASSES)
    key, kx = jax.random.split(key)
    x = jax.random.normal(kx, (B, 1, INPUT, T), dtype=jnp.float32)

    fwd = jax.jit(lstm_classifier_all_times)
    hidden_states, y_logits = fwd(x, params)
    jax.block_until_ready((hidden_states, y_logits))

    # Sanity check against a precision-matched pure-JAX reference.
    ref_h, ref_y = jax.jit(_reference)(x, params)
    jax.block_until_ready((ref_h, ref_y))
    assert hidden_states.shape == (B, T, HIDDEN)
    assert y_logits.shape == (B, T, CLASSES)
    assert jnp.allclose(hidden_states, ref_h, atol=5e-3, rtol=5e-3)
    assert jnp.allclose(y_logits, ref_y, atol=5e-3, rtol=5e-3)

    print("KERNEL_OK")
</pallas_src>

<mosaic_0001>
module attributes {stable_mosaic.version = 11 : i64} {
  func.func @kernel(%arg0: memref<16x16xf32, #tpu.memory_space<vmem>>, %arg1: memref<16x128xbf16, #tpu.memory_space<vmem>>, %arg2: memref<32x128xbf16, #tpu.memory_space<vmem>>, %arg3: memref<1x128xf32, #tpu.memory_space<vmem>>, %arg4: memref<32x128xbf16, #tpu.memory_space<vmem>>, %arg5: memref<32x128xbf16, #tpu.memory_space<vmem>>, %arg6: memref<1x128xf32, #tpu.memory_space<vmem>>, %arg7: memref<32x8xbf16, #tpu.memory_space<vmem>>, %arg8: memref<1x8xf32, #tpu.memory_space<vmem>>, %arg9: memref<2x8x32xf32, #tpu.memory_space<vmem>>, %arg10: memref<2x8x8xf32, #tpu.memory_space<vmem>>, %arg11: memref<16x32xf32, #tpu.memory_space<vmem>>) attributes {dimension_semantics = [], scalar_prefetch = 0 : i64, scratch_operands = 1 : i64, tpu.core_type = #tpu.core_type<tc>} {
    %c0 = arith.constant 0 : index
    %c0_0 = arith.constant 0 : index
    %0 = vector.load %arg0[%c0, %c0_0] : memref<16x16xf32, #tpu.memory_space<vmem>>, vector<16x16xf32>
    %c0_1 = arith.constant 0 : index
    %c0_2 = arith.constant 0 : index
    %1 = vector.load %arg1[%c0_1, %c0_2] : memref<16x128xbf16, #tpu.memory_space<vmem>>, vector<16x128xbf16>
    %c0_3 = arith.constant 0 : index
    %c0_4 = arith.constant 0 : index
    %2 = vector.load %arg2[%c0_3, %c0_4] : memref<32x128xbf16, #tpu.memory_space<vmem>>, vector<32x128xbf16>
    %c0_5 = arith.constant 0 : index
    %c0_6 = arith.constant 0 : index
    %3 = vector.load %arg3[%c0_5, %c0_6] : memref<1x128xf32, #tpu.memory_space<vmem>>, vector<1x128xf32>
    %4 = arith.truncf %0 : vector<16x16xf32> to vector<16x16xbf16>
    %cst = arith.constant dense<0.000000e+00> : vector<16x128xf32>
    %5 = tpu.matmul %4, %1, %cst {dimension_numbers = #tpu.dot_dimension_numbers<[1], [0], [0], [1], [0, 0, 1, 1], [], []>} : vector<16x16xbf16>, vector<16x128xbf16>, vector<16x128xf32> -> vector<16x128xf32>
    %6 = vector.broadcast %3 : vector<1x128xf32> to vector<16x128xf32>
    %7 = arith.addf %5, %6 : vector<16x128xf32>
    %cst_7 = arith.constant 0.000000e+00 : f32
    %8 = vector.broadcast %cst_7 : f32 to vector<2x32xf32>
    %cst_8 = arith.constant 0.000000e+00 : f32
    %9 = vector.broadcast %cst_8 : f32 to vector<2x32xf32>
    %10 = vector.extract_strided_slice %7 {offsets = [0, 0], sizes = [2, 128], strides = [1, 1]} : vector<16x128xf32> to vector<2x128xf32>
    %11 = arith.truncf %8 : vector<2x32xf32> to vector<2x32xbf16>
    %cst_9 = arith.constant dense<0.000000e+00> : vector<2x128xf32>
    %12 = tpu.matmul %11, %2, %cst_9 {dimension_numbers = #tpu.dot_dimension_numbers<[1], [0], [0], [1], [0, 0, 1, 1], [], []>} : vector<2x32xbf16>, vector<32x128xbf16>, vector<2x128xf32> -> vector<2x128xf32>
    %13 = arith.addf %10, %12 : vector<2x128xf32>
    %14 = vector.extract_strided_slice %13 {offsets = [0, 0], sizes = [2, 32], strides = [1, 1]} : vector<2x128xf32> to vector<2x32xf32>
    %15 = arith.negf %14 : vector<2x32xf32>
    %16 = math.exp %15 : vector<2x32xf32>
    %cst_10 = arith.constant 1.000000e+00 : f32
    %17 = vector.broadcast %cst_10 : f32 to vector<2x32xf32>
    %18 = arith.addf %17, %16 : vector<2x32xf32>
    %19 = arith.divf %17, %18 : vector<2x32xf32>
    %20 = vector.extract_strided_slice %13 {offsets = [0, 32], sizes = [2, 32], strides = [1, 1]} : vector<2x128xf32> to vector<2x32xf32>
    %21 = arith.negf %20 : vector<2x32xf32>
    %22 = math.exp %21 : vector<2x32xf32>
    %cst_11 = arith.constant 1.000000e+00 : f32
    %23 = vector.broadcast %cst_11 : f32 to vector<2x32xf32>
    %24 = arith.addf %23, %22 : vector<2x32xf32>
    %25 = arith.divf %23, %24 : vector<2x32xf32>
    %26 = vector.extract_strided_slice %13 {offsets = [0, 64], sizes = [2, 32], strides = [1, 1]} : vector<2x128xf32> to vector<2x32xf32>
    %27 = math.tanh %26 : vector<2x32xf32>
    %28 = vector.extract_strided_slice %13 {offsets = [0, 96], sizes = [2, 32], strides = [1, 1]} : vector<2x128xf32> to vector<2x32xf32>
    %29 = arith.negf %28 : vector<2x32xf32>
    %30 = math.exp %29 : vector<2x32xf32>
    %cst_12 = arith.constant 1.000000e+00 : f32
    %31 = vector.broadcast %cst_12 : f32 to vector<2x32xf32>
    %32 = arith.addf %31, %30 : vector<2x32xf32>
    %33 = arith.divf %31, %32 : vector<2x32xf32>
    %34 = arith.mulf %25, %9 : vector<2x32xf32>
    %35 = arith.mulf %19, %27 : vector<2x32xf32>
    %36 = arith.addf %34, %35 : vector<2x32xf32>
    %37 = math.tanh %36 : vector<2x32xf32>
    %38 = arith.mulf %33, %37 : vector<2x32xf32>
    %c0_13 = arith.constant 0 : index
    %c0_14 = arith.constant 0 : index
    %39 = vector.load %arg11[%c0_13, %c0_14] : memref<16x32xf32, #tpu.memory_space<vmem>>, vector<2x32xf32>
    tpu.vector_store %arg11[%c0_13, %c0_14], %38 {strides = array<i32>} : memref<16x32xf32, #tpu.memory_space<vmem>>, vector<2x32xf32>,
    %40 = vector.extract_strided_slice %7 {offsets = [2, 0], sizes = [2, 128], strides = [1, 1]} : vector<16x128xf32> to vector<2x128xf32>
    %41 = arith.truncf %38 : vector<2x32xf32> to vector<2x32xbf16>
    %cst_15 = arith.constant dense<0.000000e+00> : vector<2x128xf32>
    %42 = tpu.matmul %41, %2, %cst_15 {dimension_numbers = #tpu.dot_dimension_numbers<[1], [0], [0], [1], [0, 0, 1, 1], [], []>} : vector<2x32xbf16>, vector<32x128xbf16>, vector<2x128xf32> -> vector<2x128xf32>
    %43 = arith.addf %40, %42 : vector<2x128xf32>
    %44 = vector.extract_strided_slice %43 {offsets = [0, 0], sizes = [2, 32], strides = [1, 1]} : vector<2x128xf32> to vector<2x32xf32>
    %45 = arith.negf %44 : vector<2x32xf32>
    %46 = math.exp %45 : vector<2x32xf32>
    %cst_16 = arith.constant 1.000000e+00 : f32
    %47 = vector.broadcast %cst_16 : f32 to vector<2x32xf32>
    %48 = arith.addf %47, %46 : vector<2x32xf32>
    %49 = arith.divf %47, %48 : vector<2x32xf32>
    %50 = vector.extract_strided_slice %43 {offsets = [0, 32], sizes = [2, 32], strides = [1, 1]} : vector<2x128xf32> to vector<2x32xf32>
    %51 = arith.negf %50 : vector<2x32xf32>
    %52 = math.exp %51 : vector<2x32xf32>
    %cst_17 = arith.constant 1.000000e+00 : f32
    %53 = vector.broadcast %cst_17 : f32 to vector<2x32xf32>
    %54 = arith.addf %53, %52 : vector<2x32xf32>
    %55 = arith.divf %53, %54 : vector<2x32xf32>
    %56 = vector.extract_strided_slice %43 {offsets = [0, 64], sizes = [2, 32], strides = [1, 1]} : vector<2x128xf32> to vector<2x32xf32>
    %57 = math.tanh %56 : vector<2x32xf32>
    %58 = vector.extract_strided_slice %43 {offsets = [0, 96], sizes = [2, 32], strides = [1, 1]} : vector<2x128xf32> to vector<2x32xf32>
    %59 = arith.negf %58 : vector<2x32xf32>
    %60 = math.exp %59 : vector<2x32xf32>
    %cst_18 = arith.constant 1.000000e+00 : f32
    %61 = vector.broadcast %cst_18 : f32 to vector<2x32xf32>
    %62 = arith.addf %61, %60 : vector<2x32xf32>
    %63 = arith.divf %61, %62 : vector<2x32xf32>
    %64 = arith.mulf %55, %36 : vector<2x32xf32>
    %65 = arith.mulf %49, %57 : vector<2x32xf32>
    %66 = arith.addf %64, %65 : vector<2x32xf32>
    %67 = math.tanh %66 : vector<2x32xf32>
    %68 = arith.mulf %63, %67 : vector<2x32xf32>
    %c2 = arith.constant 2 : index
    %c0_19 = arith.constant 0 : index
    %69 = vector.load %arg11[%c2, %c0_19] : memref<16x32xf32, #tpu.memory_space<vmem>>, vector<2x32xf32>
    tpu.vector_store %arg11[%c2, %c0_19], %68 {strides = array<i32>} : memref<16x32xf32, #tpu.memory_space<vmem>>, vector<2x32xf32>,
    %70 = vector.extract_strided_slice %7 {offsets = [4, 0], sizes = [2, 128], strides = [1, 1]} : vector<16x128xf32> to vector<2x128xf32>
    %71 = arith.truncf %68 : vector<2x32xf32> to vector<2x32xbf16>
    %cst_20 = arith.constant dense<0.000000e+00> : vector<2x128xf32>
    %72 = tpu.matmul %71, %2, %cst_20 {dimension_numbers = #tpu.dot_dimension_numbers<[1], [0], [0], [1], [0, 0, 1, 1], [], []>} : vector<2x32xbf16>, vector<32x128xbf16>, vector<2x128xf32> -> vector<2x128xf32>
    %73 = arith.addf %70, %72 : vector<2x128xf32>
    %74 = vector.extract_strided_slice %73 {offsets = [0, 0], sizes = [2, 32], strides = [1, 1]} : vector<2x128xf32> to vector<2x32xf32>
    %75 = arith.negf %74 : vector<2x32xf32>
    %76 = math.exp %75 : vector<2x32xf32>
    %cst_21 = arith.constant 1.000000e+00 : f32
    %77 = vector.broadcast %cst_21 : f32 to vector<2x32xf32>
    %78 = arith.addf %77, %76 : vector<2x32xf32>
    %79 = arith.divf %77, %78 : vector<2x32xf32>
    %80 = vector.extract_strided_slice %73 {offsets = [0, 32], sizes = [2, 32], strides = [1, 1]} : vector<2x128xf32> to vector<2x32xf32>
    %81 = arith.negf %80 : vector<2x32xf32>
    %82 = math.exp %81 : vector<2x32xf32>
    %cst_22 = arith.constant 1.000000e+00 : f32
    %83 = vector.broadcast %cst_22 : f32 to vector<2x32xf32>
    %84 = arith.addf %83, %82 : vector<2x32xf32>
    %85 = arith.divf %83, %84 : vector<2x32xf32>
    %86 = vector.extract_strided_slice %73 {offsets = [0, 64], sizes = [2, 32], strides = [1, 1]} : vector<2x128xf32> to vector<2x32xf32>
    %87 = math.tanh %86 : vector<2x32xf32>
    %88 = vector.extract_strided_slice %73 {offsets = [0, 96], sizes = [2, 32], strides = [1, 1]} : vector<2x128xf32> to vector<2x32xf32>
    %89 = arith.negf %88 : vector<2x32xf32>
    %90 = math.exp %89 : vector<2x32xf32>
    %cst_23 = arith.constant 1.000000e+00 : f32
    %91 = vector.broadcast %cst_23 : f32 to vector<2x32xf32>
    %92 = arith.addf %91, %90 : vector<2x32xf32>
    %93 = arith.divf %91, %92 : vector<2x32xf32>
    %94 = arith.mulf %85, %66 : vector<2x32xf32>
    %95 = arith.mulf %79, %87 : vector<2x32xf32>
    %96 = arith.addf %94, %95 : vector<2x32xf32>
    %97 = math.tanh %96 : vector<2x32xf32>
    %98 = arith.mulf %93, %97 : vector<2x32xf32>
    %c4 = arith.constant 4 : index
    %c0_24 = arith.constant 0 : index
    %99 = vector.load %arg11[%c4, %c0_24] : memref<16x32xf32, #tpu.memory_space<vmem>>, vector<2x32xf32>
    tpu.vector_store %arg11[%c4, %c0_24], %98 {strides = array<i32>} : memref<16x32xf32, #tpu.memory_space<vmem>>, vector<2x32xf32>,
    %100 = vector.extract_strided_slice %7 {offsets = [6, 0], sizes = [2, 128], strides = [1, 1]} : vector<16x128xf32> to vector<2x128xf32>
    %101 = arith.truncf %98 : vector<2x32xf32> to vector<2x32xbf16>
    %cst_25 = arith.constant dense<0.000000e+00> : vector<2x128xf32>
    %102 = tpu.matmul %101, %2, %cst_25 {dimension_numbers = #tpu.dot_dimension_numbers<[1], [0], [0], [1], [0, 0, 1, 1], [], []>} : vector<2x32xbf16>, vector<32x128xbf16>, vector<2x128xf32> -> vector<2x128xf32>
    %103 = arith.addf %100, %102 : vector<2x128xf32>
    %104 = vector.extract_strided_slice %103 {offsets = [0, 0], sizes = [2, 32], strides = [1, 1]} : vector<2x128xf32> to vector<2x32xf32>
    %105 = arith.negf %104 : vector<2x32xf32>
    %106 = math.exp %105 : vector<2x32xf32>
    %cst_26 = arith.constant 1.000000e+00 : f32
    %107 = vector.broadcast %cst_26 : f32 to vector<2x32xf32>
    %108 = arith.addf %107, %106 : vector<2x32xf32>
    %109 = arith.divf %107, %108 : vector<2x32xf32>
    %110 = vector.extract_strided_slice %103 {offsets = [0, 32], sizes = [2, 32], strides = [1, 1]} : vector<2x128xf32> to vector<2x32xf32>
    %111 = arith.negf %110 : vector<2x32xf32>
    %112 = math.exp %111 : vector<2x32xf32>
    %cst_27 = arith.constant 1.000000e+00 : f32
    %113 = vector.broadcast %cst_27 : f32 to vector<2x32xf32>
    %114 = arith.addf %113, %112 : vector<2x32xf32>
    %115 = arith.divf %113, %114 : vector<2x32xf32>
    %116 = vector.extract_strided_slice %103 {offsets = [0, 64], sizes = [2, 32], strides = [1, 1]} : vector<2x128xf32> to vector<2x32xf32>
    %117 = math.tanh %116 : vector<2x32xf32>
    %118 = vector.extract_strided_slice %103 {offsets = [0, 96], sizes = [2, 32], strides = [1, 1]} : vector<2x128xf32> to vector<2x32xf32>
    %119 = arith.negf %118 : vector<2x32xf32>
    %120 = math.exp %119 : vector<2x32xf32>
    %cst_28 = arith.constant 1.000000e+00 : f32
    %121 = vector.broadcast %cst_28 : f32 to vector<2x32xf32>
    %122 = arith.addf %121, %120 : vector<2x32xf32>
    %123 = arith.divf %121, %122 : vector<2x32xf32>
    %124 = arith.mulf %115, %96 : vector<2x32xf32>
    %125 = arith.mulf %109, %117 : vector<2x32xf32>
    %126 = arith.addf %124, %125 : vector<2x32xf32>
    %127 = math.tanh %126 : vector<2x32xf32>
    %128 = arith.mulf %123, %127 : vector<2x32xf32>
    %c6 = arith.constant 6 : index
    %c0_29 = arith.constant 0 : index
    %129 = vector.load %arg11[%c6, %c0_29] : memref<16x32xf32, #tpu.memory_space<vmem>>, vector<2x32xf32>
    tpu.vector_store %arg11[%c6, %c0_29], %128 {strides = array<i32>} : memref<16x32xf32, #tpu.memory_space<vmem>>, vector<2x32xf32>,
    %130 = vector.extract_strided_slice %7 {offsets = [8, 0], sizes = [2, 128], strides = [1, 1]} : vector<16x128xf32> to vector<2x128xf32>
    %131 = arith.truncf %128 : vector<2x32xf32> to vector<2x32xbf16>
    %cst_30 = arith.constant dense<0.000000e+00> : vector<2x128xf32>
    %132 = tpu.matmul %131, %2, %cst_30 {dimension_numbers = #tpu.dot_dimension_numbers<[1], [0], [0], [1], [0, 0, 1, 1], [], []>} : vector<2x32xbf16>, vector<32x128xbf16>, vector<2x128xf32> -> vector<2x128xf32>
    %133 = arith.addf %130, %132 : vector<2x128xf32>
    %134 = vector.extract_strided_slice %133 {offsets = [0, 0], sizes = [2, 32], strides = [1, 1]} : vector<2x128xf32> to vector<2x32xf32>
    %135 = arith.negf %134 : vector<2x32xf32>
    %136 = math.exp %135 : vector<2x32xf32>
    %cst_31 = arith.constant 1.000000e+00 : f32
    %137 = vector.broadcast %cst_31 : f32 to vector<2x32xf32>
    %138 = arith.addf %137, %136 : vector<2x32xf32>
    %139 = arith.divf %137, %138 : vector<2x32xf32>
    %140 = vector.extract_strided_slice %133 {offsets = [0, 32], sizes = [2, 32], strides = [1, 1]} : vector<2x128xf32> to vector<2x32xf32>
    %141 = arith.negf %140 : vector<2x32xf32>
    %142 = math.exp %141 : vector<2x32xf32>
    %cst_32 = arith.constant 1.000000e+00 : f32
    %143 = vector.broadcast %cst_32 : f32 to vector<2x32xf32>
    %144 = arith.addf %143, %142 : vector<2x32xf32>
    %145 = arith.divf %143, %144 : vector<2x32xf32>
    %146 = vector.extract_strided_slice %133 {offsets = [0, 64], sizes = [2, 32], strides = [1, 1]} : vector<2x128xf32> to vector<2x32xf32>
    %147 = math.tanh %146 : vector<2x32xf32>
    %148 = vector.extract_strided_slice %133 {offsets = [0, 96], sizes = [2, 32], strides = [1, 1]} : vector<2x128xf32> to vector<2x32xf32>
    %149 = arith.negf %148 : vector<2x32xf32>
    %150 = math.exp %149 : vector<2x32xf32>
    %cst_33 = arith.constant 1.000000e+00 : f32
    %151 = vector.broadcast %cst_33 : f32 to vector<2x32xf32>
    %152 = arith.addf %151, %150 : vector<2x32xf32>
    %153 = arith.divf %151, %152 : vector<2x32xf32>
    %154 = arith.mulf %145, %126 : vector<2x32xf32>
    %155 = arith.mulf %139, %147 : vector<2x32xf32>
    %156 = arith.addf %154, %155 : vector<2x32xf32>
    %157 = math.tanh %156 : vector<2x32xf32>
    %158 = arith.mulf %153, %157 : vector<2x32xf32>
    %c8 = arith.constant 8 : index
    %c0_34 = arith.constant 0 : index
    %159 = vector.load %arg11[%c8, %c0_34] : memref<16x32xf32, #tpu.memory_space<vmem>>, vector<2x32xf32>
    tpu.vector_store %arg11[%c8, %c0_34], %158 {strides = array<i32>} : memref<16x32xf32, #tpu.memory_space<vmem>>, vector<2x32xf32>,
    %160 = vector.extract_strided_slice %7 {offsets = [10, 0], sizes = [2, 128], strides = [1, 1]} : vector<16x128xf32> to vector<2x128xf32>
    %161 = arith.truncf %158 : vector<2x32xf32> to vector<2x32xbf16>
    %cst_35 = arith.constant dense<0.000000e+00> : vector<2x128xf32>
    %162 = tpu.matmul %161, %2, %cst_35 {dimension_numbers = #tpu.dot_dimension_numbers<[1], [0], [0], [1], [0, 0, 1, 1], [], []>} : vector<2x32xbf16>, vector<32x128xbf16>, vector<2x128xf32> -> vector<2x128xf32>
    %163 = arith.addf %160, %162 : vector<2x128xf32>
    %164 = vector.extract_strided_slice %163 {offsets = [0, 0], sizes = [2, 32], strides = [1, 1]} : vector<2x128xf32> to vector<2x32xf32>
    %165 = arith.negf %164 : vector<2x32xf32>
    %166 = math.exp %165 : vector<2x32xf32>
    %cst_36 = arith.constant 1.000000e+00 : f32
    %167 = vector.broadcast %cst_36 : f32 to vector<2x32xf32>
    %168 = arith.addf %167, %166 : vector<2x32xf32>
    %169 = arith.divf %167, %168 : vector<2x32xf32>
    %170 = vector.extract_strided_slice %163 {offsets = [0, 32], sizes = [2, 32], strides = [1, 1]} : vector<2x128xf32> to vector<2x32xf32>
    %171 = arith.negf %170 : vector<2x32xf32>
    %172 = math.exp %171 : vector<2x32xf32>
    %cst_37 = arith.constant 1.000000e+00 : f32
    %173 = vector.broadcast %cst_37 : f32 to vector<2x32xf32>
    %174 = arith.addf %173, %172 : vector<2x32xf32>
    %175 = arith.divf %173, %174 : vector<2x32xf32>
    %176 = vector.extract_strided_slice %163 {offsets = [0, 64], sizes = [2, 32], strides = [1, 1]} : vector<2x128xf32> to vector<2x32xf32>
    %177 = math.tanh %176 : vector<2x32xf32>
    %178 = vector.extract_strided_slice %163 {offsets = [0, 96], sizes = [2, 32], strides = [1, 1]} : vector<2x128xf32> to vector<2x32xf32>
    %179 = arith.negf %178 : vector<2x32xf32>
    %180 = math.exp %179 : vector<2x32xf32>
    %cst_38 = arith.constant 1.000000e+00 : f32
    %181 = vector.broadcast %cst_38 : f32 to vector<2x32xf32>
    %182 = arith.addf %181, %180 : vector<2x32xf32>
    %183 = arith.divf %181, %182 : vector<2x32xf32>
    %184 = arith.mulf %175, %156 : vector<2x32xf32>
    %185 = arith.mulf %169, %177 : vector<2x32xf32>
    %186 = arith.addf %184, %185 : vector<2x32xf32>
    %187 = math.tanh %186 : vector<2x32xf32>
    %188 = arith.mulf %183, %187 : vector<2x32xf32>
    %c10 = arith.constant 10 : index
    %c0_39 = arith.constant 0 : index
    %189 = vector.load %arg11[%c10, %c0_39] : memref<16x32xf32, #tpu.memory_space<vmem>>, vector<2x32xf32>
    tpu.vector_store %arg11[%c10, %c0_39], %188 {strides = array<i32>} : memref<16x32xf32, #tpu.memory_space<vmem>>, vector<2x32xf32>,
    %190 = vector.extract_strided_slice %7 {offsets = [12, 0], sizes = [2, 128], strides = [1, 1]} : vector<16x128xf32> to vector<2x128xf32>
    %191 = arith.truncf %188 : vector<2x32xf32> to vector<2x32xbf16>
    %cst_40 = arith.constant dense<0.000000e+00> : vector<2x128xf32>
    %192 = tpu.matmul %191, %2, %cst_40 {dimension_numbers = #tpu.dot_dimension_numbers<[1], [0], [0], [1], [0, 0, 1, 1], [], []>} : vector<2x32xbf16>, vector<32x128xbf16>, vector<2x128xf32> -> vector<2x128xf32>
    %193 = arith.addf %190, %192 : vector<2x128xf32>
    %194 = vector.extract_strided_slice %193 {offsets = [0, 0], sizes = [2, 32], strides = [1, 1]} : vector<2x128xf32> to vector<2x32xf32>
    %195 = arith.negf %194 : vector<2x32xf32>
    %196 = math.exp %195 : vector<2x32xf32>
    %cst_41 = arith.constant 1.000000e+00 : f32
    %197 = vector.broadcast %cst_41 : f32 to vector<2x32xf32>
    %198 = arith.addf %197, %196 : vector<2x32xf32>
    %199 = arith.divf %197, %198 : vector<2x32xf32>
    %200 = vector.extract_strided_slice %193 {offsets = [0, 32], sizes = [2, 32], strides = [1, 1]} : vector<2x128xf32> to vector<2x32xf32>
    %201 = arith.negf %200 : vector<2x32xf32>
    %202 = math.exp %201 : vector<2x32xf32>
    %cst_42 = arith.constant 1.000000e+00 : f32
    %203 = vector.broadcast %cst_42 : f32 to vector<2x32xf32>
    %204 = arith.addf %203, %202 : vector<2x32xf32>
    %205 = arith.divf %203, %204 : vector<2x32xf32>
    %206 = vector.extract_strided_slice %193 {offsets = [0, 64], sizes = [2, 32], strides = [1, 1]} : vector<2x128xf32> to vector<2x32xf32>
    %207 = math.tanh %206 : vector<2x32xf32>
    %208 = vector.extract_strided_slice %193 {offsets = [0, 96], sizes = [2, 32], strides = [1, 1]} : vector<2x128xf32> to vector<2x32xf32>
    %209 = arith.negf %208 : vector<2x32xf32>
    %210 = math.exp %209 : vector<2x32xf32>
    %cst_43 = arith.constant 1.000000e+00 : f32
    %211 = vector.broadcast %cst_43 : f32 to vector<2x32xf32>
    %212 = arith.addf %211, %210 : vector<2x32xf32>
    %213 = arith.divf %211, %212 : vector<2x32xf32>
    %214 = arith.mulf %205, %186 : vector<2x32xf32>
    %215 = arith.mulf %199, %207 : vector<2x32xf32>
    %216 = arith.addf %214, %215 : vector<2x32xf32>
    %217 = math.tanh %216 : vector<2x32xf32>
    %218 = arith.mulf %213, %217 : vector<2x32xf32>
    %c12 = arith.constant 12 : index
    %c0_44 = arith.constant 0 : index
    %219 = vector.load %arg11[%c12, %c0_44] : memref<16x32xf32, #tpu.memory_space<vmem>>, vector<2x32xf32>
    tpu.vector_store %arg11[%c12, %c0_44], %218 {strides = array<i32>} : memref<16x32xf32, #tpu.memory_space<vmem>>, vector<2x32xf32>,
    %220 = vector.extract_strided_slice %7 {offsets = [14, 0], sizes = [2, 128], strides = [1, 1]} : vector<16x128xf32> to vector<2x128xf32>
    %221 = arith.truncf %218 : vector<2x32xf32> to vector<2x32xbf16>
    %cst_45 = arith.constant dense<0.000000e+00> : vector<2x128xf32>
    %222 = tpu.matmul %221, %2, %cst_45 {dimension_numbers = #tpu.dot_dimension_numbers<[1], [0], [0], [1], [0, 0, 1, 1], [], []>} : vector<2x32xbf16>, vector<32x128xbf16>, vector<2x128xf32> -> vector<2x128xf32>
    %223 = arith.addf %220, %222 : vector<2x128xf32>
    %224 = vector.extract_strided_slice %223 {offsets = [0, 0], sizes = [2, 32], strides = [1, 1]} : vector<2x128xf32> to vector<2x32xf32>
    %225 = arith.negf %224 : vector<2x32xf32>
    %226 = math.exp %225 : vector<2x32xf32>
    %cst_46 = arith.constant 1.000000e+00 : f32
    %227 = vector.broadcast %cst_46 : f32 to vector<2x32xf32>
    %228 = arith.addf %227, %226 : vector<2x32xf32>
    %229 = arith.divf %227, %228 : vector<2x32xf32>
    %230 = vector.extract_strided_slice %223 {offsets = [0, 32], sizes = [2, 32], strides = [1, 1]} : vector<2x128xf32> to vector<2x32xf32>
    %231 = arith.negf %230 : vector<2x32xf32>
    %232 = math.exp %231 : vector<2x32xf32>
    %cst_47 = arith.constant 1.000000e+00 : f32
    %233 = vector.broadcast %cst_47 : f32 to vector<2x32xf32>
    %234 = arith.addf %233, %232 : vector<2x32xf32>
    %235 = arith.divf %233, %234 : vector<2x32xf32>
    %236 = vector.extract_strided_slice %223 {offsets = [0, 64], sizes = [2, 32], strides = [1, 1]} : vector<2x128xf32> to vector<2x32xf32>
    %237 = math.tanh %236 : vector<2x32xf32>
    %238 = vector.extract_strided_slice %223 {offsets = [0, 96], sizes = [2, 32], strides = [1, 1]} : vector<2x128xf32> to vector<2x32xf32>
    %239 = arith.negf %238 : vector<2x32xf32>
    %240 = math.exp %239 : vector<2x32xf32>
    %cst_48 = arith.constant 1.000000e+00 : f32
    %241 = vector.broadcast %cst_48 : f32 to vector<2x32xf32>
    %242 = arith.addf %241, %240 : vector<2x32xf32>
    %243 = arith.divf %241, %242 : vector<2x32xf32>
    %244 = arith.mulf %235, %216 : vector<2x32xf32>
    %245 = arith.mulf %229, %237 : vector<2x32xf32>
    %246 = arith.addf %244, %245 : vector<2x32xf32>
    %247 = math.tanh %246 : vector<2x32xf32>
    %248 = arith.mulf %243, %247 : vector<2x32xf32>
    %c14 = arith.constant 14 : index
    %c0_49 = arith.constant 0 : index
    %249 = vector.load %arg11[%c14, %c0_49] : memref<16x32xf32, #tpu.memory_space<vmem>>, vector<2x32xf32>
    tpu.vector_store %arg11[%c14, %c0_49], %248 {strides = array<i32>} : memref<16x32xf32, #tpu.memory_space<vmem>>, vector<2x32xf32>,
    %c0_50 = arith.constant 0 : index
    %c0_51 = arith.constant 0 : index
    %250 = vector.load %arg11[%c0_50, %c0_51] : memref<16x32xf32, #tpu.memory_space<vmem>>, vector<16x32xf32>
    %c0_52 = arith.constant 0 : index
    %c0_53 = arith.constant 0 : index
    %251 = vector.load %arg4[%c0_52, %c0_53] : memref<32x128xbf16, #tpu.memory_space<vmem>>, vector<32x128xbf16>
    %c0_54 = arith.constant 0 : index
    %c0_55 = arith.constant 0 : index
    %252 = vector.load %arg5[%c0_54, %c0_55] : memref<32x128xbf16, #tpu.memory_space<vmem>>, vector<32x128xbf16>
    %c0_56 = arith.constant 0 : index
    %c0_57 = arith.constant 0 : index
    %253 = vector.load %arg6[%c0_56, %c0_57] : memref<1x128xf32, #tpu.memory_space<vmem>>, vector<1x128xf32>
    %254 = arith.truncf %250 : vector<16x32xf32> to vector<16x32xbf16>
    %cst_58 = arith.constant dense<0.000000e+00> : vector<16x128xf32>
    %255 = tpu.matmul %254, %251, %cst_58 {dimension_numbers = #tpu.dot_dimension_numbers<[1], [0], [0], [1], [0, 0, 1, 1], [], []>} : vector<16x32xbf16>, vector<32x128xbf16>, vector<16x128xf32> -> vector<16x128xf32>
    %256 = vector.broadcast %253 : vector<1x128xf32> to vector<16x128xf32>
    %257 = arith.addf %255, %256 : vector<16x128xf32>
    %cst_59 = arith.constant 0.000000e+00 : f32
    %258 = vector.broadcast %cst_59 : f32 to vector<2x32xf32>
    %cst_60 = arith.constant 0.000000e+00 : f32
    %259 = vector.broadcast %cst_60 : f32 to vector<2x32xf32>
    %260 = vector.extract_strided_slice %257 {offsets = [0, 0], sizes = [2, 128], strides = [1, 1]} : vector<16x128xf32> to vector<2x128xf32>
    %261 = arith.truncf %258 : vector<2x32xf32> to vector<2x32xbf16>
    %cst_61 = arith.constant dense<0.000000e+00> : vector<2x128xf32>
    %262 = tpu.matmul %261, %252, %cst_61 {dimension_numbers = #tpu.dot_dimension_numbers<[1], [0], [0], [1], [0, 0, 1, 1], [], []>} : vector<2x32xbf16>, vector<32x128xbf16>, vector<2x128xf32> -> vector<2x128xf32>
    %263 = arith.addf %260, %262 : vector<2x128xf32>
    %264 = vector.extract_strided_slice %263 {offsets = [0, 0], sizes = [2, 32], strides = [1, 1]} : vector<2x128xf32> to vector<2x32xf32>
    %265 = arith.negf %264 : vector<2x32xf32>
    %266 = math.exp %265 : vector<2x32xf32>
    %cst_62 = arith.constant 1.000000e+00 : f32
    %267 = vector.broadcast %cst_62 : f32 to vector<2x32xf32>
    %268 = arith.addf %267, %266 : vector<2x32xf32>
    %269 = arith.divf %267, %268 : vector<2x32xf32>
    %270 = vector.extract_strided_slice %263 {offsets = [0, 32], sizes = [2, 32], strides = [1, 1]} : vector<2x128xf32> to vector<2x32xf32>
    %271 = arith.negf %270 : vector<2x32xf32>
    %272 = math.exp %271 : vector<2x32xf32>
    %cst_63 = arith.constant 1.000000e+00 : f32
    %273 = vector.broadcast %cst_63 : f32 to vector<2x32xf32>
    %274 = arith.addf %273, %272 : vector<2x32xf32>
    %275 = arith.divf %273, %274 : vector<2x32xf32>
    %276 = vector.extract_strided_slice %263 {offsets = [0, 64], sizes = [2, 32], strides = [1, 1]} : vector<2x128xf32> to vector<2x32xf32>
    %277 = math.tanh %276 : vector<2x32xf32>
    %278 = vector.extract_strided_slice %263 {offsets = [0, 96], sizes = [2, 32], strides = [1, 1]} : vector<2x128xf32> to vector<2x32xf32>
    %279 = arith.negf %278 : vector<2x32xf32>
    %280 = math.exp %279 : vector<2x32xf32>
    %cst_64 = arith.constant 1.000000e+00 : f32
    %281 = vector.broadcast %cst_64 : f32 to vector<2x32xf32>
    %282 = arith.addf %281, %280 : vector<2x32xf32>
    %283 = arith.divf %281, %282 : vector<2x32xf32>
    %284 = arith.mulf %275, %259 : vector<2x32xf32>
    %285 = arith.mulf %269, %277 : vector<2x32xf32>
    %286 = arith.addf %284, %285 : vector<2x32xf32>
    %287 = math.tanh %286 : vector<2x32xf32>
    %288 = arith.mulf %283, %287 : vector<2x32xf32>
    %c0_65 = arith.constant 0 : index
    %c0_66 = arith.constant 0 : index
    %289 = vector.load %arg11[%c0_65, %c0_66] : memref<16x32xf32, #tpu.memory_space<vmem>>, vector<2x32xf32>
    tpu.vector_store %arg11[%c0_65, %c0_66], %288 {strides = array<i32>} : memref<16x32xf32, #tpu.memory_space<vmem>>, vector<2x32xf32>,
    %c0_67 = arith.constant 0 : index
    %c0_68 = arith.constant 0 : index
    %c0_69 = arith.constant 0 : index
    %290 = vector.load %arg9[%c0_67, %c0_68, %c0_69] : memref<2x8x32xf32, #tpu.memory_space<vmem>>, vector<2x1x32xf32>
    %291 = vector.shape_cast %290 : vector<2x1x32xf32> to vector<2x32xf32>
    %292 = vector.shape_cast %288 : vector<2x32xf32> to vector<2x1x32xf32>
    tpu.vector_store %arg9[%c0_67, %c0_68, %c0_69], %292 {strides = array<i32>} : memref<2x8x32xf32, #tpu.memory_space<vmem>>, vector<2x1x32xf32>,
    %293 = vector.extract_strided_slice %257 {offsets = [2, 0], sizes = [2, 128], strides = [1, 1]} : vector<16x128xf32> to vector<2x128xf32>
    %294 = arith.truncf %288 : vector<2x32xf32> to vector<2x32xbf16>
    %cst_70 = arith.constant dense<0.000000e+00> : vector<2x128xf32>
    %295 = tpu.matmul %294, %252, %cst_70 {dimension_numbers = #tpu.dot_dimension_numbers<[1], [0], [0], [1], [0, 0, 1, 1], [], []>} : vector<2x32xbf16>, vector<32x128xbf16>, vector<2x128xf32> -> vector<2x128xf32>
    %296 = arith.addf %293, %295 : vector<2x128xf32>
    %297 = vector.extract_strided_slice %296 {offsets = [0, 0], sizes = [2, 32], strides = [1, 1]} : vector<2x128xf32> to vector<2x32xf32>
    %298 = arith.negf %297 : vector<2x32xf32>
    %299 = math.exp %298 : vector<2x32xf32>
    %cst_71 = arith.constant 1.000000e+00 : f32
    %300 = vector.broadcast %cst_71 : f32 to vector<2x32xf32>
    %301 = arith.addf %300, %299 : vector<2x32xf32>
    %302 = arith.divf %300, %301 : vector<2x32xf32>
    %303 = vector.extract_strided_slice %296 {offsets = [0, 32], sizes = [2, 32], strides = [1, 1]} : vector<2x128xf32> to vector<2x32xf32>
    %304 = arith.negf %303 : vector<2x32xf32>
    %305 = math.exp %304 : vector<2x32xf32>
    %cst_72 = arith.constant 1.000000e+00 : f32
    %306 = vector.broadcast %cst_72 : f32 to vector<2x32xf32>
    %307 = arith.addf %306, %305 : vector<2x32xf32>
    %308 = arith.divf %306, %307 : vector<2x32xf32>
    %309 = vector.extract_strided_slice %296 {offsets = [0, 64], sizes = [2, 32], strides = [1, 1]} : vector<2x128xf32> to vector<2x32xf32>
    %310 = math.tanh %309 : vector<2x32xf32>
    %311 = vector.extract_strided_slice %296 {offsets = [0, 96], sizes = [2, 32], strides = [1, 1]} : vector<2x128xf32> to vector<2x32xf32>
    %312 = arith.negf %311 : vector<2x32xf32>
    %313 = math.exp %312 : vector<2x32xf32>
    %cst_73 = arith.constant 1.000000e+00 : f32
    %314 = vector.broadcast %cst_73 : f32 to vector<2x32xf32>
    %315 = arith.addf %314, %313 : vector<2x32xf32>
    %316 = arith.divf %314, %315 : vector<2x32xf32>
    %317 = arith.mulf %308, %286 : vector<2x32xf32>
    %318 = arith.mulf %302, %310 : vector<2x32xf32>
    %319 = arith.addf %317, %318 : vector<2x32xf32>
    %320 = math.tanh %319 : vector<2x32xf32>
    %321 = arith.mulf %316, %320 : vector<2x32xf32>
    %c2_74 = arith.constant 2 : index
    %c0_75 = arith.constant 0 : index
    %322 = vector.load %arg11[%c2_74, %c0_75] : memref<16x32xf32, #tpu.memory_space<vmem>>, vector<2x32xf32>
    tpu.vector_store %arg11[%c2_74, %c0_75], %321 {strides = array<i32>} : memref<16x32xf32, #tpu.memory_space<vmem>>, vector<2x32xf32>,
    %c0_76 = arith.constant 0 : index
    %c1 = arith.constant 1 : index
    %c0_77 = arith.constant 0 : index
    %323 = vector.load %arg9[%c0_76, %c1, %c0_77] : memref<2x8x32xf32, #tpu.memory_space<vmem>>, vector<2x1x32xf32>
    %324 = vector.shape_cast %323 : vector<2x1x32xf32> to vector<2x32xf32>
    %325 = vector.shape_cast %321 : vector<2x32xf32> to vector<2x1x32xf32>
    tpu.vector_store %arg9[%c0_76, %c1, %c0_77], %325 {strides = array<i32>} : memref<2x8x32xf32, #tpu.memory_space<vmem>>, vector<2x1x32xf32>,
    %326 = vector.extract_strided_slice %257 {offsets = [4, 0], sizes = [2, 128], strides = [1, 1]} : vector<16x128xf32> to vector<2x128xf32>
    %327 = arith.truncf %321 : vector<2x32xf32> to vector<2x32xbf16>
    %cst_78 = arith.constant dense<0.000000e+00> : vector<2x128xf32>
    %328 = tpu.matmul %327, %252, %cst_78 {dimension_numbers = #tpu.dot_dimension_numbers<[1], [0], [0], [1], [0, 0, 1, 1], [], []>} : vector<2x32xbf16>, vector<32x128xbf16>, vector<2x128xf32> -> vector<2x128xf32>
    %329 = arith.addf %326, %328 : vector<2x128xf32>
    %330 = vector.extract_strided_slice %329 {offsets = [0, 0], sizes = [2, 32], strides = [1, 1]} : vector<2x128xf32> to vector<2x32xf32>
    %331 = arith.negf %330 : vector<2x32xf32>
    %332 = math.exp %331 : vector<2x32xf32>
    %cst_79 = arith.constant 1.000000e+00 : f32
    %333 = vector.broadcast %cst_79 : f32 to vector<2x32xf32>
    %334 = arith.addf %333, %332 : vector<2x32xf32>
    %335 = arith.divf %333, %334 : vector<2x32xf32>
    %336 = vector.extract_strided_slice %329 {offsets = [0, 32], sizes = [2, 32], strides = [1, 1]} : vector<2x128xf32> to vector<2x32xf32>
    %337 = arith.negf %336 : vector<2x32xf32>
    %338 = math.exp %337 : vector<2x32xf32>
    %cst_80 = arith.constant 1.000000e+00 : f32
    %339 = vector.broadcast %cst_80 : f32 to vector<2x32xf32>
    %340 = arith.addf %339, %338 : vector<2x32xf32>
    %341 = arith.divf %339, %340 : vector<2x32xf32>
    %342 = vector.extract_strided_slice %329 {offsets = [0, 64], sizes = [2, 32], strides = [1, 1]} : vector<2x128xf32> to vector<2x32xf32>
    %343 = math.tanh %342 : vector<2x32xf32>
    %344 = vector.extract_strided_slice %329 {offsets = [0, 96], sizes = [2, 32], strides = [1, 1]} : vector<2x128xf32> to vector<2x32xf32>
    %345 = arith.negf %344 : vector<2x32xf32>
    %346 = math.exp %345 : vector<2x32xf32>
    %cst_81 = arith.constant 1.000000e+00 : f32
    %347 = vector.broadcast %cst_81 : f32 to vector<2x32xf32>
    %348 = arith.addf %347, %346 : vector<2x32xf32>
    %349 = arith.divf %347, %348 : vector<2x32xf32>
    %350 = arith.mulf %341, %319 : vector<2x32xf32>
    %351 = arith.mulf %335, %343 : vector<2x32xf32>
    %352 = arith.addf %350, %351 : vector<2x32xf32>
    %353 = math.tanh %352 : vector<2x32xf32>
    %354 = arith.mulf %349, %353 : vector<2x32xf32>
    %c4_82 = arith.constant 4 : index
    %c0_83 = arith.constant 0 : index
    %355 = vector.load %arg11[%c4_82, %c0_83] : memref<16x32xf32, #tpu.memory_space<vmem>>, vector<2x32xf32>
    tpu.vector_store %arg11[%c4_82, %c0_83], %354 {strides = array<i32>} : memref<16x32xf32, #tpu.memory_space<vmem>>, vector<2x32xf32>,
    %c0_84 = arith.constant 0 : index
    %c2_85 = arith.constant 2 : index
    %c0_86 = arith.constant 0 : index
    %356 = vector.load %arg9[%c0_84, %c2_85, %c0_86] : memref<2x8x32xf32, #tpu.memory_space<vmem>>, vector<2x1x32xf32>
    %357 = vector.shape_cast %356 : vector<2x1x32xf32> to vector<2x32xf32>
    %358 = vector.shape_cast %354 : vector<2x32xf32> to vector<2x1x32xf32>
    tpu.vector_store %arg9[%c0_84, %c2_85, %c0_86], %358 {strides = array<i32>} : memref<2x8x32xf32, #tpu.memory_space<vmem>>, vector<2x1x32xf32>,
    %359 = vector.extract_strided_slice %257 {offsets = [6, 0], sizes = [2, 128], strides = [1, 1]} : vector<16x128xf32> to vector<2x128xf32>
    %360 = arith.truncf %354 : vector<2x32xf32> to vector<2x32xbf16>
    %cst_87 = arith.constant dense<0.000000e+00> : vector<2x128xf32>
    %361 = tpu.matmul %360, %252, %cst_87 {dimension_numbers = #tpu.dot_dimension_numbers<[1], [0], [0], [1], [0, 0, 1, 1], [], []>} : vector<2x32xbf16>, vector<32x128xbf16>, vector<2x128xf32> -> vector<2x128xf32>
    %362 = arith.addf %359, %361 : vector<2x128xf32>
    %363 = vector.extract_strided_slice %362 {offsets = [0, 0], sizes = [2, 32], strides = [1, 1]} : vector<2x128xf32> to vector<2x32xf32>
    %364 = arith.negf %363 : vector<2x32xf32>
    %365 = math.exp %364 : vector<2x32xf32>
    %cst_88 = arith.constant 1.000000e+00 : f32
    %366 = vector.broadcast %cst_88 : f32 to vector<2x32xf32>
    %367 = arith.addf %366, %365 : vector<2x32xf32>
    %368 = arith.divf %366, %367 : vector<2x32xf32>
    %369 = vector.extract_strided_slice %362 {offsets = [0, 32], sizes = [2, 32], strides = [1, 1]} : vector<2x128xf32> to vector<2x32xf32>
    %370 = arith.negf %369 : vector<2x32xf32>
    %371 = math.exp %370 : vector<2x32xf32>
    %cst_89 = arith.constant 1.000000e+00 : f32
    %372 = vector.broadcast %cst_89 : f32 to vector<2x32xf32>
    %373 = arith.addf %372, %371 : vector<2x32xf32>
    %374 = arith.divf %372, %373 : vector<2x32xf32>
    %375 = vector.extract_strided_slice %362 {offsets = [0, 64], sizes = [2, 32], strides = [1, 1]} : vector<2x128xf32> to vector<2x32xf32>
    %376 = math.tanh %375 : vector<2x32xf32>
    %377 = vector.extract_strided_slice %362 {offsets = [0, 96], sizes = [2, 32], strides = [1, 1]} : vector<2x128xf32> to vector<2x32xf32>
    %378 = arith.negf %377 : vector<2x32xf32>
    %379 = math.exp %378 : vector<2x32xf32>
    %cst_90 = arith.constant 1.000000e+00 : f32
    %380 = vector.broadcast %cst_90 : f32 to vector<2x32xf32>
    %381 = arith.addf %380, %379 : vector<2x32xf32>
    %382 = arith.divf %380, %381 : vector<2x32xf32>
    %383 = arith.mulf %374, %352 : vector<2x32xf32>
    %384 = arith.mulf %368, %376 : vector<2x32xf32>
    %385 = arith.addf %383, %384 : vector<2x32xf32>
    %386 = math.tanh %385 : vector<2x32xf32>
    %387 = arith.mulf %382, %386 : vector<2x32xf32>
    %c6_91 = arith.constant 6 : index
    %c0_92 = arith.constant 0 : index
    %388 = vector.load %arg11[%c6_91, %c0_92] : memref<16x32xf32, #tpu.memory_space<vmem>>, vector<2x32xf32>
    tpu.vector_store %arg11[%c6_91, %c0_92], %387 {strides = array<i32>} : memref<16x32xf32, #tpu.memory_space<vmem>>, vector<2x32xf32>,
    %c0_93 = arith.constant 0 : index
    %c3 = arith.constant 3 : index
    %c0_94 = arith.constant 0 : index
    %389 = vector.load %arg9[%c0_93, %c3, %c0_94] : memref<2x8x32xf32, #tpu.memory_space<vmem>>, vector<2x1x32xf32>
    %390 = vector.shape_cast %389 : vector<2x1x32xf32> to vector<2x32xf32>
    %391 = vector.shape_cast %387 : vector<2x32xf32> to vector<2x1x32xf32>
    tpu.vector_store %arg9[%c0_93, %c3, %c0_94], %391 {strides = array<i32>} : memref<2x8x32xf32, #tpu.memory_space<vmem>>, vector<2x1x32xf32>,
    %392 = vector.extract_strided_slice %257 {offsets = [8, 0], sizes = [2, 128], strides = [1, 1]} : vector<16x128xf32> to vector<2x128xf32>
    %393 = arith.truncf %387 : vector<2x32xf32> to vector<2x32xbf16>
    %cst_95 = arith.constant dense<0.000000e+00> : vector<2x128xf32>
    %394 = tpu.matmul %393, %252, %cst_95 {dimension_numbers = #tpu.dot_dimension_numbers<[1], [0], [0], [1], [0, 0, 1, 1], [], []>} : vector<2x32xbf16>, vector<32x128xbf16>, vector<2x128xf32> -> vector<2x128xf32>
    %395 = arith.addf %392, %394 : vector<2x128xf32>
    %396 = vector.extract_strided_slice %395 {offsets = [0, 0], sizes = [2, 32], strides = [1, 1]} : vector<2x128xf32> to vector<2x32xf32>
    %397 = arith.negf %396 : vector<2x32xf32>
    %398 = math.exp %397 : vector<2x32xf32>
    %cst_96 = arith.constant 1.000000e+00 : f32
    %399 = vector.broadcast %cst_96 : f32 to vector<2x32xf32>
    %400 = arith.addf %399, %398 : vector<2x32xf32>
    %401 = arith.divf %399, %400 : vector<2x32xf32>
    %402 = vector.extract_strided_slice %395 {offsets = [0, 32], sizes = [2, 32], strides = [1, 1]} : vector<2x128xf32> to vector<2x32xf32>
    %403 = arith.negf %402 : vector<2x32xf32>
    %404 = math.exp %403 : vector<2x32xf32>
    %cst_97 = arith.constant 1.000000e+00 : f32
    %405 = vector.broadcast %cst_97 : f32 to vector<2x32xf32>
    %406 = arith.addf %405, %404 : vector<2x32xf32>
    %407 = arith.divf %405, %406 : vector<2x32xf32>
    %408 = vector.extract_strided_slice %395 {offsets = [0, 64], sizes = [2, 32], strides = [1, 1]} : vector<2x128xf32> to vector<2x32xf32>
    %409 = math.tanh %408 : vector<2x32xf32>
    %410 = vector.extract_strided_slice %395 {offsets = [0, 96], sizes = [2, 32], strides = [1, 1]} : vector<2x128xf32> to vector<2x32xf32>
    %411 = arith.negf %410 : vector<2x32xf32>
    %412 = math.exp %411 : vector<2x32xf32>
    %cst_98 = arith.constant 1.000000e+00 : f32
    %413 = vector.broadcast %cst_98 : f32 to vector<2x32xf32>
    %414 = arith.addf %413, %412 : vector<2x32xf32>
    %415 = arith.divf %413, %414 : vector<2x32xf32>
    %416 = arith.mulf %407, %385 : vector<2x32xf32>
    %417 = arith.mulf %401, %409 : vector<2x32xf32>
    %418 = arith.addf %416, %417 : vector<2x32xf32>
    %419 = math.tanh %418 : vector<2x32xf32>
    %420 = arith.mulf %415, %419 : vector<2x32xf32>
    %c8_99 = arith.constant 8 : index
    %c0_100 = arith.constant 0 : index
    %421 = vector.load %arg11[%c8_99, %c0_100] : memref<16x32xf32, #tpu.memory_space<vmem>>, vector<2x32xf32>
    tpu.vector_store %arg11[%c8_99, %c0_100], %420 {strides = array<i32>} : memref<16x32xf32, #tpu.memory_space<vmem>>, vector<2x32xf32>,
    %c0_101 = arith.constant 0 : index
    %c4_102 = arith.constant 4 : index
    %c0_103 = arith.constant 0 : index
    %422 = vector.load %arg9[%c0_101, %c4_102, %c0_103] : memref<2x8x32xf32, #tpu.memory_space<vmem>>, vector<2x1x32xf32>
    %423 = vector.shape_cast %422 : vector<2x1x32xf32> to vector<2x32xf32>
    %424 = vector.shape_cast %420 : vector<2x32xf32> to vector<2x1x32xf32>
    tpu.vector_store %arg9[%c0_101, %c4_102, %c0_103], %424 {strides = array<i32>} : memref<2x8x32xf32, #tpu.memory_space<vmem>>, vector<2x1x32xf32>,
    %425 = vector.extract_strided_slice %257 {offsets = [10, 0], sizes = [2, 128], strides = [1, 1]} : vector<16x128xf32> to vector<2x128xf32>
    %426 = arith.truncf %420 : vector<2x32xf32> to vector<2x32xbf16>
    %cst_104 = arith.constant dense<0.000000e+00> : vector<2x128xf32>
    %427 = tpu.matmul %426, %252, %cst_104 {dimension_numbers = #tpu.dot_dimension_numbers<[1], [0], [0], [1], [0, 0, 1, 1], [], []>} : vector<2x32xbf16>, vector<32x128xbf16>, vector<2x128xf32> -> vector<2x128xf32>
    %428 = arith.addf %425, %427 : vector<2x128xf32>
    %429 = vector.extract_strided_slice %428 {offsets = [0, 0], sizes = [2, 32], strides = [1, 1]} : vector<2x128xf32> to vector<2x32xf32>
    %430 = arith.negf %429 : vector<2x32xf32>
    %431 = math.exp %430 : vector<2x32xf32>
    %cst_105 = arith.constant 1.000000e+00 : f32
    %432 = vector.broadcast %cst_105 : f32 to vector<2x32xf32>
    %433 = arith.addf %432, %431 : vector<2x32xf32>
    %434 = arith.divf %432, %433 : vector<2x32xf32>
    %435 = vector.extract_strided_slice %428 {offsets = [0, 32], sizes = [2, 32], strides = [1, 1]} : vector<2x128xf32> to vector<2x32xf32>
    %436 = arith.negf %435 : vector<2x32xf32>
    %437 = math.exp %436 : vector<2x32xf32>
    %cst_106 = arith.constant 1.000000e+00 : f32
    %438 = vector.broadcast %cst_106 : f32 to vector<2x32xf32>
    %439 = arith.addf %438, %437 : vector<2x32xf32>
    %440 = arith.divf %438, %439 : vector<2x32xf32>
    %441 = vector.extract_strided_slice %428 {offsets = [0, 64], sizes = [2, 32], strides = [1, 1]} : vector<2x128xf32> to vector<2x32xf32>
    %442 = math.tanh %441 : vector<2x32xf32>
    %443 = vector.extract_strided_slice %428 {offsets = [0, 96], sizes = [2, 32], strides = [1, 1]} : vector<2x128xf32> to vector<2x32xf32>
    %444 = arith.negf %443 : vector<2x32xf32>
    %445 = math.exp %444 : vector<2x32xf32>
    %cst_107 = arith.constant 1.000000e+00 : f32
    %446 = vector.broadcast %cst_107 : f32 to vector<2x32xf32>
    %447 = arith.addf %446, %445 : vector<2x32xf32>
    %448 = arith.divf %446, %447 : vector<2x32xf32>
    %449 = arith.mulf %440, %418 : vector<2x32xf32>
    %450 = arith.mulf %434, %442 : vector<2x32xf32>
    %451 = arith.addf %449, %450 : vector<2x32xf32>
    %452 = math.tanh %451 : vector<2x32xf32>
    %453 = arith.mulf %448, %452 : vector<2x32xf32>
    %c10_108 = arith.constant 10 : index
    %c0_109 = arith.constant 0 : index
    %454 = vector.load %arg11[%c10_108, %c0_109] : memref<16x32xf32, #tpu.memory_space<vmem>>, vector<2x32xf32>
    tpu.vector_store %arg11[%c10_108, %c0_109], %453 {strides = array<i32>} : memref<16x32xf32, #tpu.memory_space<vmem>>, vector<2x32xf32>,
    %c0_110 = arith.constant 0 : index
    %c5 = arith.constant 5 : index
    %c0_111 = arith.constant 0 : index
    %455 = vector.load %arg9[%c0_110, %c5, %c0_111] : memref<2x8x32xf32, #tpu.memory_space<vmem>>, vector<2x1x32xf32>
    %456 = vector.shape_cast %455 : vector<2x1x32xf32> to vector<2x32xf32>
    %457 = vector.shape_cast %453 : vector<2x32xf32> to vector<2x1x32xf32>
    tpu.vector_store %arg9[%c0_110, %c5, %c0_111], %457 {strides = array<i32>} : memref<2x8x32xf32, #tpu.memory_space<vmem>>, vector<2x1x32xf32>,
    %458 = vector.extract_strided_slice %257 {offsets = [12, 0], sizes = [2, 128], strides = [1, 1]} : vector<16x128xf32> to vector<2x128xf32>
    %459 = arith.truncf %453 : vector<2x32xf32> to vector<2x32xbf16>
    %cst_112 = arith.constant dense<0.000000e+00> : vector<2x128xf32>
    %460 = tpu.matmul %459, %252, %cst_112 {dimension_numbers = #tpu.dot_dimension_numbers<[1], [0], [0], [1], [0, 0, 1, 1], [], []>} : vector<2x32xbf16>, vector<32x128xbf16>, vector<2x128xf32> -> vector<2x128xf32>
    %461 = arith.addf %458, %460 : vector<2x128xf32>
    %462 = vector.extract_strided_slice %461 {offsets = [0, 0], sizes = [2, 32], strides = [1, 1]} : vector<2x128xf32> to vector<2x32xf32>
    %463 = arith.negf %462 : vector<2x32xf32>
    %464 = math.exp %463 : vector<2x32xf32>
    %cst_113 = arith.constant 1.000000e+00 : f32
    %465 = vector.broadcast %cst_113 : f32 to vector<2x32xf32>
    %466 = arith.addf %465, %464 : vector<2x32xf32>
    %467 = arith.divf %465, %466 : vector<2x32xf32>
    %468 = vector.extract_strided_slice %461 {offsets = [0, 32], sizes = [2, 32], strides = [1, 1]} : vector<2x128xf32> to vector<2x32xf32>
    %469 = arith.negf %468 : vector<2x32xf32>
    %470 = math.exp %469 : vector<2x32xf32>
    %cst_114 = arith.constant 1.000000e+00 : f32
    %471 = vector.broadcast %cst_114 : f32 to vector<2x32xf32>
    %472 = arith.addf %471, %470 : vector<2x32xf32>
    %473 = arith.divf %471, %472 : vector<2x32xf32>
    %474 = vector.extract_strided_slice %461 {offsets = [0, 64], sizes = [2, 32], strides = [1, 1]} : vector<2x128xf32> to vector<2x32xf32>
    %475 = math.tanh %474 : vector<2x32xf32>
    %476 = vector.extract_strided_slice %461 {offsets = [0, 96], sizes = [2, 32], strides = [1, 1]} : vector<2x128xf32> to vector<2x32xf32>
    %477 = arith.negf %476 : vector<2x32xf32>
    %478 = math.exp %477 : vector<2x32xf32>
    %cst_115 = arith.constant 1.000000e+00 : f32
    %479 = vector.broadcast %cst_115 : f32 to vector<2x32xf32>
    %480 = arith.addf %479, %478 : vector<2x32xf32>
    %481 = arith.divf %479, %480 : vector<2x32xf32>
    %482 = arith.mulf %473, %451 : vector<2x32xf32>
    %483 = arith.mulf %467, %475 : vector<2x32xf32>
    %484 = arith.addf %482, %483 : vector<2x32xf32>
    %485 = math.tanh %484 : vector<2x32xf32>
    %486 = arith.mulf %481, %485 : vector<2x32xf32>
    %c12_116 = arith.constant 12 : index
    %c0_117 = arith.constant 0 : index
    %487 = vector.load %arg11[%c12_116, %c0_117] : memref<16x32xf32, #tpu.memory_space<vmem>>, vector<2x32xf32>
    tpu.vector_store %arg11[%c12_116, %c0_117], %486 {strides = array<i32>} : memref<16x32xf32, #tpu.memory_space<vmem>>, vector<2x32xf32>,
    %c0_118 = arith.constant 0 : index
    %c6_119 = arith.constant 6 : index
    %c0_120 = arith.constant 0 : index
    %488 = vector.load %arg9[%c0_118, %c6_119, %c0_120] : memref<2x8x32xf32, #tpu.memory_space<vmem>>, vector<2x1x32xf32>
    %489 = vector.shape_cast %488 : vector<2x1x32xf32> to vector<2x32xf32>
    %490 = vector.shape_cast %486 : vector<2x32xf32> to vector<2x1x32xf32>
    tpu.vector_store %arg9[%c0_118, %c6_119, %c0_120], %490 {strides = array<i32>} : memref<2x8x32xf32, #tpu.memory_space<vmem>>, vector<2x1x32xf32>,
    %491 = vector.extract_strided_slice %257 {offsets = [14, 0], sizes = [2, 128], strides = [1, 1]} : vector<16x128xf32> to vector<2x128xf32>
    %492 = arith.truncf %486 : vector<2x32xf32> to vector<2x32xbf16>
    %cst_121 = arith.constant dense<0.000000e+00> : vector<2x128xf32>
    %493 = tpu.matmul %492, %252, %cst_121 {dimension_numbers = #tpu.dot_dimension_numbers<[1], [0], [0], [1], [0, 0, 1, 1], [], []>} : vector<2x32xbf16>, vector<32x128xbf16>, vector<2x128xf32> -> vector<2x128xf32>
    %494 = arith.addf %491, %493 : vector<2x128xf32>
    %495 = vector.extract_strided_slice %494 {offsets = [0, 0], sizes = [2, 32], strides = [1, 1]} : vector<2x128xf32> to vector<2x32xf32>
    %496 = arith.negf %495 : vector<2x32xf32>
    %497 = math.exp %496 : vector<2x32xf32>
    %cst_122 = arith.constant 1.000000e+00 : f32
    %498 = vector.broadcast %cst_122 : f32 to vector<2x32xf32>
    %499 = arith.addf %498, %497 : vector<2x32xf32>
    %500 = arith.divf %498, %499 : vector<2x32xf32>
    %501 = vector.extract_strided_slice %494 {offsets = [0, 32], sizes = [2, 32], strides = [1, 1]} : vector<2x128xf32> to vector<2x32xf32>
    %502 = arith.negf %501 : vector<2x32xf32>
    %503 = math.exp %502 : vector<2x32xf32>
    %cst_123 = arith.constant 1.000000e+00 : f32
    %504 = vector.broadcast %cst_123 : f32 to vector<2x32xf32>
    %505 = arith.addf %504, %503 : vector<2x32xf32>
    %506 = arith.divf %504, %505 : vector<2x32xf32>
    %507 = vector.extract_strided_slice %494 {offsets = [0, 64], sizes = [2, 32], strides = [1, 1]} : vector<2x128xf32> to vector<2x32xf32>
    %508 = math.tanh %507 : vector<2x32xf32>
    %509 = vector.extract_strided_slice %494 {offsets = [0, 96], sizes = [2, 32], strides = [1, 1]} : vector<2x128xf32> to vector<2x32xf32>
    %510 = arith.negf %509 : vector<2x32xf32>
    %511 = math.exp %510 : vector<2x32xf32>
    %cst_124 = arith.constant 1.000000e+00 : f32
    %512 = vector.broadcast %cst_124 : f32 to vector<2x32xf32>
    %513 = arith.addf %512, %511 : vector<2x32xf32>
    %514 = arith.divf %512, %513 : vector<2x32xf32>
    %515 = arith.mulf %506, %484 : vector<2x32xf32>
    %516 = arith.mulf %500, %508 : vector<2x32xf32>
    %517 = arith.addf %515, %516 : vector<2x32xf32>
    %518 = math.tanh %517 : vector<2x32xf32>
    %519 = arith.mulf %514, %518 : vector<2x32xf32>
    %c14_125 = arith.constant 14 : index
    %c0_126 = arith.constant 0 : index
    %520 = vector.load %arg11[%c14_125, %c0_126] : memref<16x32xf32, #tpu.memory_space<vmem>>, vector<2x32xf32>
    tpu.vector_store %arg11[%c14_125, %c0_126], %519 {strides = array<i32>} : memref<16x32xf32, #tpu.memory_space<vmem>>, vector<2x32xf32>,
    %c0_127 = arith.constant 0 : index
    %c7 = arith.constant 7 : index
    %c0_128 = arith.constant 0 : index
    %521 = vector.load %arg9[%c0_127, %c7, %c0_128] : memref<2x8x32xf32, #tpu.memory_space<vmem>>, vector<2x1x32xf32>
    %522 = vector.shape_cast %521 : vector<2x1x32xf32> to vector<2x32xf32>
    %523 = vector.shape_cast %519 : vector<2x32xf32> to vector<2x1x32xf32>
    tpu.vector_store %arg9[%c0_127, %c7, %c0_128], %523 {strides = array<i32>} : memref<2x8x32xf32, #tpu.memory_space<vmem>>, vector<2x1x32xf32>,
    %c0_129 = arith.constant 0 : index
    %c0_130 = arith.constant 0 : index
    %524 = vector.load %arg11[%c0_129, %c0_130] : memref<16x32xf32, #tpu.memory_space<vmem>>, vector<16x32xf32>
    %525 = arith.truncf %524 : vector<16x32xf32> to vector<16x32xbf16>
    %c0_131 = arith.constant 0 : index
    %c0_132 = arith.constant 0 : index
    %526 = vector.load %arg7[%c0_131, %c0_132] : memref<32x8xbf16, #tpu.memory_space<vmem>>, vector<32x8xbf16>
    %cst_133 = arith.constant dense<0.000000e+00> : vector<16x8xf32>
    %527 = tpu.matmul %525, %526, %cst_133 {dimension_numbers = #tpu.dot_dimension_numbers<[1], [0], [0], [1], [0, 0, 1, 1], [], []>} : vector<16x32xbf16>, vector<32x8xbf16>, vector<16x8xf32> -> vector<16x8xf32>
    %c0_134 = arith.constant 0 : index
    %c0_135 = arith.constant 0 : index
    %528 = vector.load %arg8[%c0_134, %c0_135] : memref<1x8xf32, #tpu.memory_space<vmem>>, vector<1x8xf32>
    %529 = vector.broadcast %528 : vector<1x8xf32> to vector<16x8xf32>
    %530 = arith.addf %527, %529 : vector<16x8xf32>
    %531 = vector.extract_strided_slice %530 {offsets = [0, 0], sizes = [2, 8], strides = [1, 1]} : vector<16x8xf32> to vector<2x8xf32>
    %c0_136 = arith.constant 0 : index
    %c0_137 = arith.constant 0 : index
    %c0_138 = arith.constant 0 : index
    %532 = vector.load %arg10[%c0_136, %c0_137, %c0_138] : memref<2x8x8xf32, #tpu.memory_space<vmem>>, vector<2x1x8xf32>
    %533 = vector.shape_cast %532 : vector<2x1x8xf32> to vector<2x8xf32>
    %534 = vector.shape_cast %531 : vector<2x8xf32> to vector<2x1x8xf32>
    tpu.vector_store %arg10[%c0_136, %c0_137, %c0_138], %534 {strides = array<i32>} : memref<2x8x8xf32, #tpu.memory_space<vmem>>, vector<2x1x8xf32>,
    %535 = vector.extract_strided_slice %530 {offsets = [2, 0], sizes = [2, 8], strides = [1, 1]} : vector<16x8xf32> to vector<2x8xf32>
    %c0_139 = arith.constant 0 : index
    %c1_140 = arith.constant 1 : index
    %c0_141 = arith.constant 0 : index
    %536 = vector.load %arg10[%c0_139, %c1_140, %c0_141] : memref<2x8x8xf32, #tpu.memory_space<vmem>>, vector<2x1x8xf32>
    %537 = vector.shape_cast %536 : vector<2x1x8xf32> to vector<2x8xf32>
    %538 = vector.shape_cast %535 : vector<2x8xf32> to vector<2x1x8xf32>
    tpu.vector_store %arg10[%c0_139, %c1_140, %c0_141], %538 {strides = array<i32>} : memref<2x8x8xf32, #tpu.memory_space<vmem>>, vector<2x1x8xf32>,
    %539 = vector.extract_strided_slice %530 {offsets = [4, 0], sizes = [2, 8], strides = [1, 1]} : vector<16x8xf32> to vector<2x8xf32>
    %c0_142 = arith.constant 0 : index
    %c2_143 = arith.constant 2 : index
    %c0_144 = arith.constant 0 : index
    %540 = vector.load %arg10[%c0_142, %c2_143, %c0_144] : memref<2x8x8xf32, #tpu.memory_space<vmem>>, vector<2x1x8xf32>
    %541 = vector.shape_cast %540 : vector<2x1x8xf32> to vector<2x8xf32>
    %542 = vector.shape_cast %539 : vector<2x8xf32> to vector<2x1x8xf32>
    tpu.vector_store %arg10[%c0_142, %c2_143, %c0_144], %542 {strides = array<i32>} : memref<2x8x8xf32, #tpu.memory_space<vmem>>, vector<2x1x8xf32>,
    %543 = vector.extract_strided_slice %530 {offsets = [6, 0], sizes = [2, 8], strides = [1, 1]} : vector<16x8xf32> to vector<2x8xf32>
    %c0_145 = arith.constant 0 : index
    %c3_146 = arith.constant 3 : index
    %c0_147 = arith.constant 0 : index
    %544 = vector.load %arg10[%c0_145, %c3_146, %c0_147] : memref<2x8x8xf32, #tpu.memory_space<vmem>>, vector<2x1x8xf32>
    %545 = vector.shape_cast %544 : vector<2x1x8xf32> to vector<2x8xf32>
    %546 = vector.shape_cast %543 : vector<2x8xf32> to vector<2x1x8xf32>
    tpu.vector_store %arg10[%c0_145, %c3_146, %c0_147], %546 {strides = array<i32>} : memref<2x8x8xf32, #tpu.memory_space<vmem>>, vector<2x1x8xf32>,
    %547 = vector.extract_strided_slice %530 {offsets = [8, 0], sizes = [2, 8], strides = [1, 1]} : vector<16x8xf32> to vector<2x8xf32>
    %c0_148 = arith.constant 0 : index
    %c4_149 = arith.constant 4 : index
    %c0_150 = arith.constant 0 : index
    %548 = vector.load %arg10[%c0_148, %c4_149, %c0_150] : memref<2x8x8xf32, #tpu.memory_space<vmem>>, vector<2x1x8xf32>
    %549 = vector.shape_cast %548 : vector<2x1x8xf32> to vector<2x8xf32>
    %550 = vector.shape_cast %547 : vector<2x8xf32> to vector<2x1x8xf32>
    tpu.vector_store %arg10[%c0_148, %c4_149, %c0_150], %550 {strides = array<i32>} : memref<2x8x8xf32, #tpu.memory_space<vmem>>, vector<2x1x8xf32>,
    %551 = vector.extract_strided_slice %530 {offsets = [10, 0], sizes = [2, 8], strides = [1, 1]} : vector<16x8xf32> to vector<2x8xf32>
    %c0_151 = arith.constant 0 : index
    %c5_152 = arith.constant 5 : index
    %c0_153 = arith.constant 0 : index
    %552 = vector.load %arg10[%c0_151, %c5_152, %c0_153] : memref<2x8x8xf32, #tpu.memory_space<vmem>>, vector<2x1x8xf32>
    %553 = vector.shape_cast %552 : vector<2x1x8xf32> to vector<2x8xf32>
    %554 = vector.shape_cast %551 : vector<2x8xf32> to vector<2x1x8xf32>
    tpu.vector_store %arg10[%c0_151, %c5_152, %c0_153], %554 {strides = array<i32>} : memref<2x8x8xf32, #tpu.memory_space<vmem>>, vector<2x1x8xf32>,
    %555 = vector.extract_strided_slice %530 {offsets = [12, 0], sizes = [2, 8], strides = [1, 1]} : vector<16x8xf32> to vector<2x8xf32>
    %c0_154 = arith.constant 0 : index
    %c6_155 = arith.constant 6 : index
    %c0_156 = arith.constant 0 : index
    %556 = vector.load %arg10[%c0_154, %c6_155, %c0_156] : memref<2x8x8xf32, #tpu.memory_space<vmem>>, vector<2x1x8xf32>
    %557 = vector.shape_cast %556 : vector<2x1x8xf32> to vector<2x8xf32>
    %558 = vector.shape_cast %555 : vector<2x8xf32> to vector<2x1x8xf32>
    tpu.vector_store %arg10[%c0_154, %c6_155, %c0_156], %558 {strides = array<i32>} : memref<2x8x8xf32, #tpu.memory_space<vmem>>, vector<2x1x8xf32>,
    %559 = vector.extract_strided_slice %530 {offsets = [14, 0], sizes = [2, 8], strides = [1, 1]} : vector<16x8xf32> to vector<2x8xf32>
    %c0_157 = arith.constant 0 : index
    %c7_158 = arith.constant 7 : index
    %c0_159 = arith.constant 0 : index
    %560 = vector.load %arg10[%c0_157, %c7_158, %c0_159] : memref<2x8x8xf32, #tpu.memory_space<vmem>>, vector<2x1x8xf32>
    %561 = vector.shape_cast %560 : vector<2x1x8xf32> to vector<2x8xf32>
    %562 = vector.shape_cast %559 : vector<2x8xf32> to vector<2x1x8xf32>
    tpu.vector_store %arg10[%c0_157, %c7_158, %c0_159], %562 {strides = array<i32>} : memref<2x8x8xf32, #tpu.memory_space<vmem>>, vector<2x1x8xf32>,
    return
  }
}

</mosaic_0001>

<llo_original>
// kernel: lstm_classifier_all_times.1
$region0: #{lstm_classifier_all_times.1}
  #allocation0 [shape = 'u32[]', space=smem, size = 0x4, offset = 0x4, fixed_abs, tag = 'smem constant byte address 0x4 - core index']
  #allocation1 [shape = 'u32[72,128]{1,0:T(1,128)}', space=vmem, size = 0x9000, scoped, tag = 'internal scratch']
  #allocation2 [shape = 'f32[16,32]{1,0:T(8,128)}', space=vmem, size = 0x2000, scoped, tag = 'scratch operand']
  %s0 = inlined_call_operand.vmem [shape: f32[16,16], index: 0, kind: input, shape index: {}]
  %s1 = inlined_call_operand.vmem [shape: bf16[16,128], index: 1, kind: input, shape index: {}]
  %s2 = inlined_call_operand.vmem [shape: bf16[32,128], index: 2, kind: input, shape index: {}]
  %s3 = inlined_call_operand.vmem [shape: f32[1,128], index: 3, kind: input, shape index: {}]
  %s4 = inlined_call_operand.vmem [shape: bf16[32,128], index: 4, kind: input, shape index: {}]
  %s5 = inlined_call_operand.vmem [shape: bf16[32,128], index: 5, kind: input, shape index: {}]
  %s6 = inlined_call_operand.vmem [shape: f32[1,128], index: 6, kind: input, shape index: {}]
  %s7 = inlined_call_operand.vmem [shape: bf16[32,8], index: 7, kind: input, shape index: {}]
  %s8 = inlined_call_operand.vmem [shape: f32[1,8], index: 8, kind: input, shape index: {}]
  %s9 = inlined_call_operand.hbm [shape: f32[2,8,32], index: 9, kind: output, shape index: {0}]
  %s10 = inlined_call_operand.hbm [shape: f32[2,8,8], index: 10, kind: output, shape index: {1}]
  %11 = xla_tuple %s9, %s10
  %s12 = sld [smem:[#allocation0]]
  $region54: #{lstm_classifier_all_times.1} parent=0
    _
  %s14 = ssub.s32 1, %s12
  %s15 = scalar_select 0, %s14, %s12
  $region1: #{lstm_classifier_all_times.1} parent=0
    #allocation3 [shape = 'u8[8192]{0}', space=vmem, size = 0x2000, scoped, tag = 'output window, operand 0, single buffered']
    #allocation4 [shape = 's32[1]{0}', space=sflag, size = 0x4, scoped, tag = 'scoped memory for lstm_classifier_all_times.1']
    #allocation5 [shape = 'u8[8192]{0}', space=vmem, size = 0x2000, scoped, tag = 'output window, operand 1, single buffered']
    #allocation6 [shape = 's32[1]{0}', space=sflag, size = 0x4, scoped, tag = 'scoped memory for lstm_classifier_all_times.1']
    %16 = vsyncpa [#allocation4], 0
    %17 = vsyncpa [#allocation6], 0
    // Predicated region
    $region2: #{lstm_classifier_all_times.1} parent=1 // pred_check
      _
    $region3: #{lstm_classifier_all_times.1} parent=1 // pred_check_branch
      %19 = sbr.rel (0) target = $region5
    $region4: #{lstm_classifier_all_times.1} parent=1 // pred_region
      _
    $region5: #{lstm_classifier_all_times.1} parent=1 // pred_fallthru
      _
    // Predicated region
    $region6: #{lstm_classifier_all_times.1} parent=1 // pred_check
      _
    $region7: #{lstm_classifier_all_times.1} parent=1 // pred_check_branch
      %21 = sbr.rel (0) target = $region9
    $region8: #{lstm_classifier_all_times.1} parent=1 // pred_region
      _
    $region9: #{lstm_classifier_all_times.1} parent=1 // pred_fallthru
      _
    // Predicated region
    $region10: #{lstm_classifier_all_times.1} parent=1 // pred_check
      _
    $region11: #{lstm_classifier_all_times.1} parent=1 // pred_check_branch
      %23 = sbr.rel (0) target = $region13
    $region12: #{lstm_classifier_all_times.1} parent=1 // pred_region
      _
    $region13: #{lstm_classifier_all_times.1} parent=1 // pred_fallthru
      _
    // Predicated region
    $region14: #{lstm_classifier_all_times.1} parent=1 // pred_check
      _
    $region15: #{lstm_classifier_all_times.1} parent=1 // pred_check_branch
      %25 = sbr.rel (0) target = $region17
    $region16: #{lstm_classifier_all_times.1} parent=1 // pred_region
      _
    $region17: #{lstm_classifier_all_times.1} parent=1 // pred_fallthru
      _
    // Predicated region
    $region18: #{lstm_classifier_all_times.1} parent=1 // pred_check
      _
    $region19: #{lstm_classifier_all_times.1} parent=1 // pred_check_branch
      %27 = sbr.rel (0) target = $region21
    $region20: #{lstm_classifier_all_times.1} parent=1 // pred_region
      _
    $region21: #{lstm_classifier_all_times.1} parent=1 // pred_fallthru
      _
    // Predicated region
    $region22: #{lstm_classifier_all_times.1} parent=1 // pred_check
      _
    $region23: #{lstm_classifier_all_times.1} parent=1 // pred_check_branch
      %29 = sbr.rel (0) target = $region25
    $region24: #{lstm_classifier_all_times.1} parent=1 // pred_region
      _
    $region25: #{lstm_classifier_all_times.1} parent=1 // pred_fallthru
      _
    // Predicated region
    $region26: #{lstm_classifier_all_times.1} parent=1 // pred_check
      _
    $region27: #{lstm_classifier_all_times.1} parent=1 // pred_check_branch
      %31 = sbr.rel (0) target = $region29
    $region28: #{lstm_classifier_all_times.1} parent=1 // pred_region
      _
    $region29: #{lstm_classifier_all_times.1} parent=1 // pred_fallthru
      _
    // Predicated region
    $region30: #{lstm_classifier_all_times.1} parent=1 // pred_check
      _
    $region31: #{lstm_classifier_all_times.1} parent=1 // pred_check_branch
      %33 = sbr.rel (0) target = $region33
    $region32: #{lstm_classifier_all_times.1} parent=1 // pred_region
      _
    $region33: #{lstm_classifier_all_times.1} parent=1 // pred_fallthru
      _
    // Predicated region
    $region34: #{lstm_classifier_all_times.1} parent=1 // pred_check
      _
    $region35: #{lstm_classifier_all_times.1} parent=1 // pred_check_branch
      %35 = sbr.rel (0) target = $region37
    $region36: #{lstm_classifier_all_times.1} parent=1 // pred_region
      _
    $region37: #{lstm_classifier_all_times.1} parent=1 // pred_fallthru
      _
    %v37 = vld [vmem:[%s0] sm:$0xff]
    %v38 = vld [vmem:[%s0 + $0x8] sm:$0xff]
    %v39 = vld [vmem:[%s1] sm:$0xf]
    %v40 = vld [vmem:[%s1 + $0x4] sm:$0xf]
    %v41 = vld [vmem:[%s2] sm:$0xf]
    %v42 = vld [vmem:[%s2 + $0x4] sm:$0xf]
    %v43 = vld [vmem:[%s2 + $0x8] sm:$0xf]
    %v44 = vld [vmem:[%s2 + $0xc] sm:$0xf]
    %v45 = vld [vmem:[%s3] sm:$0x1]
    %v46 = vpack.c.bf16 %v38, %v37
    %v48 = vperm.slane %v45, 0
    %v52 = vunpack.c.l.b16 %v39
    %v53 = vunpack.c.l.b16 %v40
    %v54 = vpack.c.b16 %v53, %v52
    %vm56 = vcmask 130048
    %v58 = vsel %vm56, %v46, 0
    %60 = vmatpush.bf16.msra.mxu0 0
    %61 = vmatpush.bf16.msra.mxu0 0
    %62 = vmatpush.bf16.msra.mxu0 0
    %63 = vmatpush.bf16.msra.mxu0 0
    %64 = vmatpush.bf16.msra.mxu0 0
    %65 = vmatpush.bf16.msra.mxu0 0
    %66 = vmatpush.bf16.msra.mxu0 0
    %67 = vmatpush.bf16.msra.mxu0 %v54
    %68 = vmatmul.bf16.gmra.mxu0 %v58
    %v69 = vpop.f32.mrf.mxu0
    %v70 = vadd.f32 %v48, %v69
    %v71 = vpop.f32.mrf.mxu0
    %v72 = vadd.f32 %v48, %v71
    %73 = vdwg.mxu0
    %v78 = vunpack.c.l.b16 %v41
    %v79 = vunpack.c.l.b16 %v42
    %v80 = vunpack.c.l.b16 %v43
    %v81 = vunpack.c.l.b16 %v44
    %v82 = vpack.c.b16 %v79, %v78
    %v83 = vpack.c.b16 %v81, %v80
    %vm86 = vcmask 261120
    %v88 = vsel %vm86, 0, 0
    %90 = vmatpush.bf16.msra.mxu0 0
    %91 = vmatpush.bf16.msra.mxu0 0
    %92 = vmatpush.bf16.msra.mxu0 0
    %93 = vmatpush.bf16.msra.mxu0 0
    %94 = vmatpush.bf16.msra.mxu0 0
    %95 = vmatpush.bf16.msra.mxu0 0
    %96 = vmatpush.bf16.msra.mxu0 %v83
    %97 = vmatpush.bf16.msra.mxu0 %v82
    %98 = vmatmul.bf16.gmra.mxu0 %v88
    %v99 = vpop.f32.mrf.mxu0
    %v100 = vadd.f32 0.0, %v99
    %v101 = vpop.f32.mrf.mxu0
    %102 = vdwg.mxu0
    %v103 = vadd.f32 %v70, %v100
    %v104 = vxor.u32 %v103, 2147483648
    %v105 = vmul.f32 %v104, 1.442695
    %v106 = vpow.pop %v105
    %v107 = vadd.f32 %v106, 1.0
    %v108 = vrcp.pop %v107
    %v109 = vmul.f32 %v107, %v108
    %v110 = vsub.f32 1.0, %v109
    %v111 = vmul.f32 %v108, %v110
    %v112 = vadd.f32 %v108, %v111
    %vm113 = vweird.f32 %v107
    %vm114 = vweird.f32 %v108
    %vm115 = vmor %vm113, %vm114
    %v116 = vsel %vm115, %v108, %v112
    %v117 = vand.u32 2147483647, %v107
    %vm118 = vcmp.eq.f32.partialorder %v117, 8.507059e+37
    %v119 = vand.u32 %v107, 2147483648
    %v120 = vor.u32 1.1754944e-38, %v119
    %v121 = vsel %vm118, %v120, %v116
    %v122 = vmul.f32 1.0, %v121
    %v123 = vtanh.pop %v103
    %v124 = vmul.f32 %v122, 0.0
    %126 = vrot.lane.b32.xlu0 %v123, 64
    %v127 = vpop.permute.xlu0 %126
    %v129 = vmul.f32 %v122, %v127
    %131 = vrot.lane.b32.xlu0 %v129, 32
    %v132 = vpop.permute.xlu0 %131
    %v134 = vadd.f32 %v124, %v132
    %v135 = vtanh.pop %v134
    %137 = vrot.lane.b32.xlu0 %v135, 64
    %v138 = vpop.permute.xlu0 %137
    %v140 = vmul.f32 %v122, %v138
    %142 = vrot.lane.b32.xlu0 %v140, 32
    %v143 = vpop.permute.xlu0 %142
    %vm145 = vcmask 254976
    %146 = vst.msk [vmem:[#allocation2] sm:$0x3] %vm145, %v143
    %v147 = vpack.c.bf16 %v140, %v140
    %149 = vrot.lane.b32.xlu0 %v147, 32
    %v150 = vpop.permute.xlu0 %149
    %v152 = vsel %vm86, %v150, 0
    %154 = vmatpush.bf16.msra.mxu0 0
    %155 = vmatpush.bf16.msra.mxu0 0
    %156 = vmatpush.bf16.msra.mxu0 0
    %157 = vmatpush.bf16.msra.mxu0 0
    %158 = vmatpush.bf16.msra.mxu0 0
    %159 = vmatpush.bf16.msra.mxu0 0
    %160 = vmatpush.bf16.msra.mxu0 %v83
    %161 = vmatpush.bf16.msra.mxu0 %v82
    %162 = vmatmul.bf16.gmra.mxu0 %v152
    %v163 = vpop.f32.mrf.mxu0
    %v164 = vadd.f32 0.0, %v163
    %v165 = vpop.f32.mrf.mxu0
    %166 = vdwg.mxu0
    %v168 = vrot.slane %v164, 6
    %v170 = vadd.f32 %v70, %v168
    %v171 = vxor.u32 %v170, 2147483648
    %v172 = vmul.f32 %v171, 1.442695
    %v173 = vpow.pop %v172
    %v174 = vadd.f32 %v173, 1.0
    %v175 = vrcp.pop %v174
    %v176 = vmul.f32 %v174, %v175
    %v177 = vsub.f32 1.0, %v176
    %v178 = vmul.f32 %v175, %v177
    %v179 = vadd.f32 %v175, %v178
    %vm180 = vweird.f32 %v174
    %vm181 = vweird.f32 %v175
    %vm182 = vmor %vm180, %vm181
    %v183 = vsel %vm182, %v175, %v179
    %v184 = vand.u32 2147483647, %v174
    %vm185 = vcmp.eq.f32.partialorder %v184, 8.507059e+37
    %v186 = vand.u32 %v174, 2147483648
    %v187 = vor.u32 1.1754944e-38, %v186
    %v188 = vsel %vm185, %v187, %v183
    %v189 = vmul.f32 1.0, %v188
    %v190 = vtanh.pop %v170
    %v192 = vrot.slane %v134, 6
    %v194 = vmul.f32 %v189, %v192
    %196 = vrot.lane.b32.xlu0 %v190, 64
    %v197 = vpop.permute.xlu0 %196
    %v199 = vmul.f32 %v189, %v197
    %201 = vrot.lane.b32.xlu0 %v199, 32
    %v202 = vpop.permute.xlu0 %201
    %v204 = vadd.f32 %v194, %v202
    %v205 = vtanh.pop %v204
    %207 = vrot.lane.b32.xlu0 %v205, 64
    %v208 = vpop.permute.xlu0 %207
    %v210 = vmul.f32 %v189, %v208
    %212 = vrot.lane.b32.xlu0 %v210, 32
    %v213 = vpop.permute.xlu0 %212
    %vm215 = vcmask 257026
    %216 = vst.msk [vmem:[#allocation2] sm:$0xc] %vm215, %v213
    %v217 = vpack.c.bf16 %v210, %v210
    %v219 = vrot.slane %v217, 1
    %220 = vrot.lane.b32.xlu0 %v219, 32
    %v221 = vpop.permute.xlu0 %220
    %v223 = vsel %vm86, %v221, 0
    %225 = vmatpush.bf16.msra.mxu0 0
    %226 = vmatpush.bf16.msra.mxu0 0
    %227 = vmatpush.bf16.msra.mxu0 0
    %228 = vmatpush.bf16.msra.mxu0 0
    %229 = vmatpush.bf16.msra.mxu0 0
    %230 = vmatpush.bf16.msra.mxu0 0
    %231 = vmatpush.bf16.msra.mxu0 %v83
    %232 = vmatpush.bf16.msra.mxu0 %v82
    %233 = vmatmul.bf16.gmra.mxu0 %v223
    %v234 = vpop.f32.mrf.mxu0
    %v235 = vadd.f32 0.0, %v234
    %v236 = vpop.f32.mrf.mxu0
    %237 = vdwg.mxu0
    %v239 = vrot.slane %v235, 4
    %v241 = vadd.f32 %v70, %v239
    %v242 = vxor.u32 %v241, 2147483648
    %v243 = vmul.f32 %v242, 1.442695
    %v244 = vpow.pop %v243
    %v245 = vadd.f32 %v244, 1.0
    %v246 = vrcp.pop %v245
    %v247 = vmul.f32 %v245, %v246
    %v248 = vsub.f32 1.0, %v247
    %v249 = vmul.f32 %v246, %v248
    %v250 = vadd.f32 %v246, %v249
    %vm251 = vweird.f32 %v245
    %vm252 = vweird.f32 %v246
    %vm253 = vmor %vm251, %vm252
    %v254 = vsel %vm253, %v246, %v250
    %v255 = vand.u32 2147483647, %v245
    %vm256 = vcmp.eq.f32.partialorder %v255, 8.507059e+37
    %v257 = vand.u32 %v245, 2147483648
    %v258 = vor.u32 1.1754944e-38, %v257
    %v259 = vsel %vm256, %v258, %v254
    %v260 = vmul.f32 1.0, %v259
    %v261 = vtanh.pop %v241
    %v263 = vrot.slane %v204, 6
    %v265 = vmul.f32 %v260, %v263
    %267 = vrot.lane.b32.xlu0 %v261, 64
    %v268 = vpop.permute.xlu0 %267
    %v270 = vmul.f32 %v260, %v268
    %272 = vrot.lane.b32.xlu0 %v270, 32
    %v273 = vpop.permute.xlu0 %272
    %v275 = vadd.f32 %v265, %v273
    %v276 = vtanh.pop %v275
    %278 = vrot.lane.b32.xlu0 %v276, 64
    %v279 = vpop.permute.xlu0 %278
    %v281 = vmul.f32 %v260, %v279
    %283 = vrot.lane.b32.xlu0 %v281, 32
    %v284 = vpop.permute.xlu0 %283
    %vm286 = vcmask 259076
    %287 = vst.msk [vmem:[#allocation2] sm:$0x30] %vm286, %v284
    %v288 = vpack.c.bf16 %v281, %v281
    %v290 = vrot.slane %v288, 2
    %291 = vrot.lane.b32.xlu0 %v290, 32
    %v292 = vpop.permute.xlu0 %291
    %v294 = vsel %vm86, %v292, 0
    %296 = vmatpush.bf16.msra.mxu0 0
    %297 = vmatpush.bf16.msra.mxu0 0
    %298 = vmatpush.bf16.msra.mxu0 0
    %299 = vmatpush.bf16.msra.mxu0 0
    %300 = vmatpush.bf16.msra.mxu0 0
    %301 = vmatpush.bf16.msra.mxu0 0
    %302 = vmatpush.bf16.msra.mxu0 %v83
    %303 = vmatpush.bf16.msra.mxu0 %v82
    %304 = vmatmul.bf16.gmra.mxu0 %v294
    %v305 = vpop.f32.mrf.mxu0
    %v306 = vadd.f32 0.0, %v305
    %v307 = vpop.f32.mrf.mxu0
    %308 = vdwg.mxu0
    %v310 = vrot.slane %v306, 2
    %v312 = vadd.f32 %v70, %v310
    %v313 = vxor.u32 %v312, 2147483648
    %v314 = vmul.f32 %v313, 1.442695
    %v315 = vpow.pop %v314
    %v316 = vadd.f32 %v315, 1.0
    %v317 = vrcp.pop %v316
    %v318 = vmul.f32 %v316, %v317
    %v319 = vsub.f32 1.0, %v318
    %v320 = vmul.f32 %v317, %v319
    %v321 = vadd.f32 %v317, %v320
    %vm322 = vweird.f32 %v316
    %vm323 = vweird.f32 %v317
    %vm324 = vmor %vm322, %vm323
    %v325 = vsel %vm324, %v317, %v321
    %v326 = vand.u32 2147483647, %v316
    %vm327 = vcmp.eq.f32.partialorder %v326, 8.507059e+37
    %v328 = vand.u32 %v316, 2147483648
    %v329 = vor.u32 1.1754944e-38, %v328
    %v330 = vsel %vm327, %v329, %v325
    %v331 = vmul.f32 1.0, %v330
    %v332 = vtanh.pop %v312
    %v334 = vrot.slane %v275, 6
    %v336 = vmul.f32 %v331, %v334
    %338 = vrot.lane.b32.xlu0 %v332, 64
    %v339 = vpop.permute.xlu0 %338
    %v341 = vmul.f32 %v331, %v339
    %343 = vrot.lane.b32.xlu0 %v341, 32
    %v344 = vpop.permute.xlu0 %343
    %v346 = vadd.f32 %v336, %v344
    %v347 = vtanh.pop %v346
    %349 = vrot.lane.b32.xlu0 %v347, 64
    %v350 = vpop.permute.xlu0 %349
    %v352 = vmul.f32 %v331, %v350
    %354 = vrot.lane.b32.xlu0 %v352, 32
    %v355 = vpop.permute.xlu0 %354
    %vm357 = vcmask 261126
    %358 = vst.msk [vmem:[#allocation2] sm:$0xc0] %vm357, %v355
    %v359 = vpack.c.bf16 %v352, %v352
    %v361 = vrot.slane %v359, 3
    %362 = vrot.lane.b32.xlu0 %v361, 32
    %v363 = vpop.permute.xlu0 %362
    %v365 = vsel %vm86, %v363, 0
    %367 = vmatpush.bf16.msra.mxu0 0
    %368 = vmatpush.bf16.msra.mxu0 0
    %369 = vmatpush.bf16.msra.mxu0 0
    %370 = vmatpush.bf16.msra.mxu0 0
    %371 = vmatpush.bf16.msra.mxu0 0
    %372 = vmatpush.bf16.msra.mxu0 0
    %373 = vmatpush.bf16.msra.mxu0 %v83
    %374 = vmatpush.bf16.msra.mxu0 %v82
    %375 = vmatmul.bf16.gmra.mxu0 %v365
    %v376 = vpop.f32.mrf.mxu0
    %v377 = vadd.f32 0.0, %v376
    %v378 = vpop.f32.mrf.mxu0
    %379 = vdwg.mxu0
    %v380 = vadd.f32 %v72, %v377
    %v381 = vxor.u32 %v380, 2147483648
    %v382 = vmul.f32 %v381, 1.442695
    %v383 = vpow.pop %v382
    %v384 = vadd.f32 %v383, 1.0
    %v385 = vrcp.pop %v384
    %v386 = vmul.f32 %v384, %v385
    %v387 = vsub.f32 1.0, %v386
    %v388 = vmul.f32 %v385, %v387
    %v389 = vadd.f32 %v385, %v388
    %vm390 = vweird.f32 %v384
    %vm391 = vweird.f32 %v385
    %vm392 = vmor %vm390, %vm391
    %v393 = vsel %vm392, %v385, %v389
    %v394 = vand.u32 2147483647, %v384
    %vm395 = vcmp.eq.f32.partialorder %v394, 8.507059e+37
    %v396 = vand.u32 %v384, 2147483648
    %v397 = vor.u32 1.1754944e-38, %v396
    %v398 = vsel %vm395, %v397, %v393
    %v399 = vmul.f32 1.0, %v398
    %v400 = vtanh.pop %v380
    %v402 = vrot.slane %v346, 6
    %v404 = vmul.f32 %v399, %v402
    %406 = vrot.lane.b32.xlu0 %v400, 64
    %v407 = vpop.permute.xlu0 %406
    %v409 = vmul.f32 %v399, %v407
    %411 = vrot.lane.b32.xlu0 %v409, 32
    %v412 = vpop.permute.xlu0 %411
    %v414 = vadd.f32 %v404, %v412
    %v415 = vtanh.pop %v414
    %417 = vrot.lane.b32.xlu0 %v415, 64
    %v418 = vpop.permute.xlu0 %417
    %v420 = vmul.f32 %v399, %v418
    %422 = vrot.lane.b32.xlu0 %v420, 32
    %v423 = vpop.permute.xlu0 %422
    %425 = vst.msk [vmem:[#allocation2 + $0x8] sm:$0x3] %vm145, %v423
    %v426 = vpack.c.bf16 %v420, %v420
    %428 = vrot.lane.b32.xlu0 %v426, 32
    %v429 = vpop.permute.xlu0 %428
    %v431 = vsel %vm86, %v429, 0
    %433 = vmatpush.bf16.msra.mxu0 0
    %434 = vmatpush.bf16.msra.mxu0 0
    %435 = vmatpush.bf16.msra.mxu0 0
    %436 = vmatpush.bf16.msra.mxu0 0
    %437 = vmatpush.bf16.msra.mxu0 0
    %438 = vmatpush.bf16.msra.mxu0 0
    %439 = vmatpush.bf16.msra.mxu0 %v83
    %440 = vmatpush.bf16.msra.mxu0 %v82
    %441 = vmatmul.bf16.gmra.mxu0 %v431
    %v442 = vpop.f32.mrf.mxu0
    %v443 = vadd.f32 0.0, %v442
    %v444 = vpop.f32.mrf.mxu0
    %445 = vdwg.mxu0
    %v447 = vrot.slane %v443, 6
    %v449 = vadd.f32 %v72, %v447
    %v450 = vxor.u32 %v449, 2147483648
    %v451 = vmul.f32 %v450, 1.442695
    %v452 = vpow.pop %v451
    %v453 = vadd.f32 %v452, 1.0
    %v454 = vrcp.pop %v453
    %v455 = vmul.f32 %v453, %v454
    %v456 = vsub.f32 1.0, %v455
    %v457 = vmul.f32 %v454, %v456
    %v458 = vadd.f32 %v454, %v457
    %vm459 = vweird.f32 %v453
    %vm460 = vweird.f32 %v454
    %vm461 = vmor %vm459, %vm460
    %v462 = vsel %vm461, %v454, %v458
    %v463 = vand.u32 2147483647, %v453
    %vm464 = vcmp.eq.f32.partialorder %v463, 8.507059e+37
    %v465 = vand.u32 %v453, 2147483648
    %v466 = vor.u32 1.1754944e-38, %v465
    %v467 = vsel %vm464, %v466, %v462
    %v468 = vmul.f32 1.0, %v467
    %v469 = vtanh.pop %v449
    %v471 = vrot.slane %v414, 6
    %v473 = vmul.f32 %v468, %v471
    %475 = vrot.lane.b32.xlu0 %v469, 64
    %v476 = vpop.permute.xlu0 %475
    %v478 = vmul.f32 %v468, %v476
    %480 = vrot.lane.b32.xlu0 %v478, 32
    %v481 = vpop.permute.xlu0 %480
    %v483 = vadd.f32 %v473, %v481
    %v484 = vtanh.pop %v483
    %486 = vrot.lane.b32.xlu0 %v484, 64
    %v487 = vpop.permute.xlu0 %486
    %v489 = vmul.f32 %v468, %v487
    %491 = vrot.lane.b32.xlu0 %v489, 32
    %v492 = vpop.permute.xlu0 %491
    %494 = vst.msk [vmem:[#allocation2 + $0x8] sm:$0xc] %vm215, %v492
    %v495 = vpack.c.bf16 %v489, %v489
    %v497 = vrot.slane %v495, 1
    %498 = vrot.lane.b32.xlu0 %v497, 32
    %v499 = vpop.permute.xlu0 %498
    %v501 = vsel %vm86, %v499, 0
    %503 = vmatpush.bf16.msra.mxu0 0
    %504 = vmatpush.bf16.msra.mxu0 0
    %505 = vmatpush.bf16.msra.mxu0 0
    %506 = vmatpush.bf16.msra.mxu0 0
    %507 = vmatpush.bf16.msra.mxu0 0
    %508 = vmatpush.bf16.msra.mxu0 0
    %509 = vmatpush.bf16.msra.mxu0 %v83
    %510 = vmatpush.bf16.msra.mxu0 %v82
    %511 = vmatmul.bf16.gmra.mxu0 %v501
    %v512 = vpop.f32.mrf.mxu0
    %v513 = vadd.f32 0.0, %v512
    %v514 = vpop.f32.mrf.mxu0
    %515 = vdwg.mxu0
    %v517 = vrot.slane %v513, 4
    %v519 = vadd.f32 %v72, %v517
    %v520 = vxor.u32 %v519, 2147483648
    %v521 = vmul.f32 %v520, 1.442695
    %v522 = vpow.pop %v521
    %v523 = vadd.f32 %v522, 1.0
    %v524 = vrcp.pop %v523
    %v525 = vmul.f32 %v523, %v524
    %v526 = vsub.f32 1.0, %v525
    %v527 = vmul.f32 %v524, %v526
    %v528 = vadd.f32 %v524, %v527
    %vm529 = vweird.f32 %v523
    %vm530 = vweird.f32 %v524
    %vm531 = vmor %vm529, %vm530
    %v532 = vsel %vm531, %v524, %v528
    %v533 = vand.u32 2147483647, %v523
    %vm534 = vcmp.eq.f32.partialorder %v533, 8.507059e+37
    %v535 = vand.u32 %v523, 2147483648
    %v536 = vor.u32 1.1754944e-38, %v535
    %v537 = vsel %vm534, %v536, %v532
    %v538 = vmul.f32 1.0, %v537
    %v539 = vtanh.pop %v519
    %v541 = vrot.slane %v483, 6
    %v543 = vmul.f32 %v538, %v541
    %545 = vrot.lane.b32.xlu0 %v539, 64
    %v546 = vpop.permute.xlu0 %545
    %v548 = vmul.f32 %v538, %v546
    %550 = vrot.lane.b32.xlu0 %v548, 32
    %v551 = vpop.permute.xlu0 %550
    %v553 = vadd.f32 %v543, %v551
    %v554 = vtanh.pop %v553
    %556 = vrot.lane.b32.xlu0 %v554, 64
    %v557 = vpop.permute.xlu0 %556
    %v559 = vmul.f32 %v538, %v557
    %561 = vrot.lane.b32.xlu0 %v559, 32
    %v562 = vpop.permute.xlu0 %561
    %564 = vst.msk [vmem:[#allocation2 + $0x8] sm:$0x30] %vm286, %v562
    %v565 = vpack.c.bf16 %v559, %v559
    %v567 = vrot.slane %v565, 2
    %568 = vrot.lane.b32.xlu0 %v567, 32
    %v569 = vpop.permute.xlu0 %568
    %v571 = vsel %vm86, %v569, 0
    %573 = vmatpush.bf16.msra.mxu0 0
    %574 = vmatpush.bf16.msra.mxu0 0
    %575 = vmatpush.bf16.msra.mxu0 0
    %576 = vmatpush.bf16.msra.mxu0 0
    %577 = vmatpush.bf16.msra.mxu0 0
    %578 = vmatpush.bf16.msra.mxu0 0
    %579 = vmatpush.bf16.msra.mxu0 %v83
    %580 = vmatpush.bf16.msra.mxu0 %v82
    %581 = vmatmul.bf16.gmra.mxu0 %v571
    %v582 = vpop.f32.mrf.mxu0
    %v583 = vadd.f32 0.0, %v582
    %v584 = vpop.f32.mrf.mxu0
    %585 = vdwg.mxu0
    %v587 = vrot.slane %v583, 2
    %v589 = vadd.f32 %v72, %v587
    %v590 = vxor.u32 %v589, 2147483648
    %v591 = vmul.f32 %v590, 1.442695
    %v592 = vpow.pop %v591
    %v593 = vadd.f32 %v592, 1.0
    %v594 = vrcp.pop %v593
    %v595 = vmul.f32 %v593, %v594
    %v596 = vsub.f32 1.0, %v595
    %v597 = vmul.f32 %v594, %v596
    %v598 = vadd.f32 %v594, %v597
    %vm599 = vweird.f32 %v593
    %vm600 = vweird.f32 %v594
    %vm601 = vmor %vm599, %vm600
    %v602 = vsel %vm601, %v594, %v598
    %v603 = vand.u32 2147483647, %v593
    %vm604 = vcmp.eq.f32.partialorder %v603, 8.507059e+37
    %v605 = vand.u32 %v593, 2147483648
    %v606 = vor.u32 1.1754944e-38, %v605
    %v607 = vsel %vm604, %v606, %v602
    %v608 = vmul.f32 1.0, %v607
    %v609 = vtanh.pop %v589
    %v611 = vrot.slane %v553, 6
    %v613 = vmul.f32 %v608, %v611
    %615 = vrot.lane.b32.xlu0 %v609, 64
    %v616 = vpop.permute.xlu0 %615
    %v618 = vmul.f32 %v608, %v616
    %620 = vrot.lane.b32.xlu0 %v618, 32
    %v621 = vpop.permute.xlu0 %620
    %v623 = vadd.f32 %v613, %v621
    %v624 = vtanh.pop %v623
    %626 = vrot.lane.b32.xlu0 %v624, 64
    %v627 = vpop.permute.xlu0 %626
    %v629 = vmul.f32 %v608, %v627
    %631 = vrot.lane.b32.xlu0 %v629, 32
    %v632 = vpop.permute.xlu0 %631
    %634 = vst.msk [vmem:[#allocation2 + $0x8] sm:$0xc0] %vm357, %v632
    %v635 = vld [vmem:[#allocation2] sm:$0xff]
    %v636 = vld [vmem:[#allocation2 + $0x8] sm:$0xff]
    %v637 = vld [vmem:[%s4] sm:$0xf]
    %v638 = vld [vmem:[%s4 + $0x4] sm:$0xf]
    %v639 = vld [vmem:[%s4 + $0x8] sm:$0xf]
    %v640 = vld [vmem:[%s4 + $0xc] sm:$0xf]
    %v641 = vld [vmem:[%s5] sm:$0xf]
    %v642 = vld [vmem:[%s5 + $0x4] sm:$0xf]
    %v643 = vld [vmem:[%s5 + $0x8] sm:$0xf]
    %v644 = vld [vmem:[%s5 + $0xc] sm:$0xf]
    %v645 = vld [vmem:[%s6] sm:$0x1]
    %v646 = vpack.c.bf16 %v636, %v635
    %v648 = vperm.slane %v645, 0
    %v654 = vunpack.c.l.b16 %v637
    %v655 = vunpack.c.l.b16 %v638
    %v656 = vunpack.c.l.b16 %v639
    %v657 = vunpack.c.l.b16 %v640
    %v658 = vpack.c.b16 %v655, %v654
    %v659 = vpack.c.b16 %v657, %v656
    %v663 = vsel %vm86, %v646, 0
    %665 = vmatpush.bf16.msra.mxu0 0
    %666 = vmatpush.bf16.msra.mxu0 0
    %667 = vmatpush.bf16.msra.mxu0 0
    %668 = vmatpush.bf16.msra.mxu0 0
    %669 = vmatpush.bf16.msra.mxu0 0
    %670 = vmatpush.bf16.msra.mxu0 0
    %671 = vmatpush.bf16.msra.mxu0 %v659
    %672 = vmatpush.bf16.msra.mxu0 %v658
    %673 = vmatmul.bf16.gmra.mxu0 %v663
    %v674 = vpop.f32.mrf.mxu0
    %v675 = vadd.f32 %v648, %v674
    %v676 = vpop.f32.mrf.mxu0
    %v677 = vadd.f32 %v648, %v676
    %678 = vdwg.mxu0
    %v683 = vunpack.c.l.b16 %v641
    %v684 = vunpack.c.l.b16 %v642
    %v685 = vunpack.c.l.b16 %v643
    %v686 = vunpack.c.l.b16 %v644
    %v687 = vpack.c.b16 %v684, %v683
    %v688 = vpack.c.b16 %v686, %v685
    %691 = vmatpush.bf16.msra.mxu0 0
    %692 = vmatpush.bf16.msra.mxu0 0
    %693 = vmatpush.bf16.msra.mxu0 0
    %694 = vmatpush.bf16.msra.mxu0 0
    %695 = vmatpush.bf16.msra.mxu0 0
    %696 = vmatpush.bf16.msra.mxu0 0
    %697 = vmatpush.bf16.msra.mxu0 %v688
    %698 = vmatpush.bf16.msra.mxu0 %v687
    %699 = vmatmul.bf16.gmra.mxu0 %v88
    %v700 = vpop.f32.mrf.mxu0
    %v701 = vadd.f32 0.0, %v700
    %v702 = vpop.f32.mrf.mxu0
    %703 = vdwg.mxu0
    %v704 = vadd.f32 %v675, %v701
    %v705 = vxor.u32 %v704, 2147483648
    %v706 = vmul.f32 %v705, 1.442695
    %v707 = vpow.pop %v706
    %v708 = vadd.f32 %v707, 1.0
    %v709 = vrcp.pop %v708
    %v710 = vmul.f32 %v708, %v709
    %v711 = vsub.f32 1.0, %v710
    %v712 = vmul.f32 %v709, %v711
    %v713 = vadd.f32 %v709, %v712
    %vm714 = vweird.f32 %v708
    %vm715 = vweird.f32 %v709
    %vm716 = vmor %vm714, %vm715
    %v717 = vsel %vm716, %v709, %v713
    %v718 = vand.u32 2147483647, %v708
    %vm719 = vcmp.eq.f32.partialorder %v718, 8.507059e+37
    %v720 = vand.u32 %v708, 2147483648
    %v721 = vor.u32 1.1754944e-38, %v720
    %v722 = vsel %vm719, %v721, %v717
    %v723 = vmul.f32 1.0, %v722
    %v724 = vtanh.pop %v704
    %v725 = vmul.f32 %v723, 0.0
    %727 = vrot.lane.b32.xlu0 %v724, 64
    %v728 = vpop.permute.xlu0 %727
    %v730 = vmul.f32 %v723, %v728
    %732 = vrot.lane.b32.xlu0 %v730, 32
    %v733 = vpop.permute.xlu0 %732
    %v735 = vadd.f32 %v725, %v733
    %v736 = vtanh.pop %v735
    %738 = vrot.lane.b32.xlu0 %v736, 64
    %v739 = vpop.permute.xlu0 %738
    %v741 = vmul.f32 %v723, %v739
    %743 = vrot.lane.b32.xlu0 %v741, 32
    %v744 = vpop.permute.xlu0 %743
    %746 = vst.msk [vmem:[#allocation2] sm:$0x3] %vm145, %v744
    %v747 = vrot.slane %v741, 1
    %v748 = vperm.slane %v741, 0
    %v749 = vperm.slane %v747, 0
    %750 = vrot.lane.b32.xlu0 %v748, 32
    %v751 = vpop.permute.xlu0 %750
    %752 = vrot.lane.b32.xlu0 %v749, 32
    %v753 = vpop.permute.xlu0 %752
    %vm756 = vcmask 253952
    %757 = vst.msk [vmem:[#allocation3] sm:$0x1] %vm756, %v751
    %758 = vst.msk [vmem:[#allocation3 + $0x8] sm:$0x1] %vm756, %v753
    %v759 = vpack.c.bf16 %v741, %v741
    %761 = vrot.lane.b32.xlu0 %v759, 32
    %v762 = vpop.permute.xlu0 %761
    %v764 = vsel %vm86, %v762, 0
    %766 = vmatpush.bf16.msra.mxu0 0
    %767 = vmatpush.bf16.msra.mxu0 0
    %768 = vmatpush.bf16.msra.mxu0 0
    %769 = vmatpush.bf16.msra.mxu0 0
    %770 = vmatpush.bf16.msra.mxu0 0
    %771 = vmatpush.bf16.msra.mxu0 0
    %772 = vmatpush.bf16.msra.mxu0 %v688
    %773 = vmatpush.bf16.msra.mxu0 %v687
    %774 = vmatmul.bf16.gmra.mxu0 %v764
    %v775 = vpop.f32.mrf.mxu0
    %v776 = vadd.f32 0.0, %v775
    %v777 = vpop.f32.mrf.mxu0
    %778 = vdwg.mxu0
    %v780 = vrot.slane %v776, 6
    %v782 = vadd.f32 %v675, %v780
    %v783 = vxor.u32 %v782, 2147483648
    %v784 = vmul.f32 %v783, 1.442695
    %v785 = vpow.pop %v784
    %v786 = vadd.f32 %v785, 1.0
    %v787 = vrcp.pop %v786
    %v788 = vmul.f32 %v786, %v787
    %v789 = vsub.f32 1.0, %v788
    %v790 = vmul.f32 %v787, %v789
    %v791 = vadd.f32 %v787, %v790
    %vm792 = vweird.f32 %v786
    %vm793 = vweird.f32 %v787
    %vm794 = vmor %vm792, %vm793
    %v795 = vsel %vm794, %v787, %v791
    %v796 = vand.u32 2147483647, %v786
    %vm797 = vcmp.eq.f32.partialorder %v796, 8.507059e+37
    %v798 = vand.u32 %v786, 2147483648
    %v799 = vor.u32 1.1754944e-38, %v798
    %v800 = vsel %vm797, %v799, %v795
    %v801 = vmul.f32 1.0, %v800
    %v802 = vtanh.pop %v782
    %v804 = vrot.slane %v735, 6
    %v806 = vmul.f32 %v801, %v804
    %808 = vrot.lane.b32.xlu0 %v802, 64
    %v809 = vpop.permute.xlu0 %808
    %v811 = vmul.f32 %v801, %v809
    %813 = vrot.lane.b32.xlu0 %v811, 32
    %v814 = vpop.permute.xlu0 %813
    %v816 = vadd.f32 %v806, %v814
    %v817 = vtanh.pop %v816
    %819 = vrot.lane.b32.xlu0 %v817, 64
    %v820 = vpop.permute.xlu0 %819
    %v822 = vmul.f32 %v801, %v820
    %824 = vrot.lane.b32.xlu0 %v822, 32
    %v825 = vpop.permute.xlu0 %824
    %827 = vst.msk [vmem:[#allocation2] sm:$0xc] %vm215, %v825
    %828 = vst [vmem:[#allocation1] sm:$0xff] %v822
    %s829 = scalar_lea.vmem [#allocation1], 2
    %v830 = vld [vmem:[%s829] ss:$9 sm:$0xff]
    %s831 = scalar_lea.vmem [#allocation1], 3
    %v832 = vld [vmem:[%s831] ss:$9 sm:$0xff]
    %v833 = vperm.slane %v830, 0
    %v834 = vperm.slane %v832, 0
    %835 = vrot.lane.b32.xlu0 %v833, 32
    %v836 = vpop.permute.xlu0 %835
    %837 = vrot.lane.b32.xlu0 %v834, 32
    %v838 = vpop.permute.xlu0 %837
    %841 = vst.msk [vmem:[#allocation3 + $0x1] sm:$0x1] %vm756, %v836
    %842 = vst.msk [vmem:[#allocation3 + $0x9] sm:$0x1] %vm756, %v838
    %v843 = vpack.c.bf16 %v822, %v822
    %v845 = vrot.slane %v843, 1
    %846 = vrot.lane.b32.xlu0 %v845, 32
    %v847 = vpop.permute.xlu0 %846
    %v849 = vsel %vm86, %v847, 0
    %851 = vmatpush.bf16.msra.mxu0 0
    %852 = vmatpush.bf16.msra.mxu0 0
    %853 = vmatpush.bf16.msra.mxu0 0
    %854 = vmatpush.bf16.msra.mxu0 0
    %855 = vmatpush.bf16.msra.mxu0 0
    %856 = vmatpush.bf16.msra.mxu0 0
    %857 = vmatpush.bf16.msra.mxu0 %v688
    %858 = vmatpush.bf16.msra.mxu0 %v687
    %859 = vmatmul.bf16.gmra.mxu0 %v849
    %v860 = vpop.f32.mrf.mxu0
    %v861 = vadd.f32 0.0, %v860
    %v862 = vpop.f32.mrf.mxu0
    %863 = vdwg.mxu0
    %v865 = vrot.slane %v861, 4
    %v867 = vadd.f32 %v675, %v865
    %v868 = vxor.u32 %v867, 2147483648
    %v869 = vmul.f32 %v868, 1.442695
    %v870 = vpow.pop %v869
    %v871 = vadd.f32 %v870, 1.0
    %v872 = vrcp.pop %v871
    %v873 = vmul.f32 %v871, %v872
    %v874 = vsub.f32 1.0, %v873
    %v875 = vmul.f32 %v872, %v874
    %v876 = vadd.f32 %v872, %v875
    %vm877 = vweird.f32 %v871
    %vm878 = vweird.f32 %v872
    %vm879 = vmor %vm877, %vm878
    %v880 = vsel %vm879, %v872, %v876
    %v881 = vand.u32 2147483647, %v871
    %vm882 = vcmp.eq.f32.partialorder %v881, 8.507059e+37
    %v883 = vand.u32 %v871, 2147483648
    %v884 = vor.u32 1.1754944e-38, %v883
    %v885 = vsel %vm882, %v884, %v880
    %v886 = vmul.f32 1.0, %v885
    %v887 = vtanh.pop %v867
    %v889 = vrot.slane %v816, 6
    %v891 = vmul.f32 %v886, %v889
    %893 = vrot.lane.b32.xlu0 %v887, 64
    %v894 = vpop.permute.xlu0 %893
    %v896 = vmul.f32 %v886, %v894
    %898 = vrot.lane.b32.xlu0 %v896, 32
    %v899 = vpop.permute.xlu0 %898
    %v901 = vadd.f32 %v891, %v899
    %v902 = vtanh.pop %v901
    %904 = vrot.lane.b32.xlu0 %v902, 64
    %v905 = vpop.permute.xlu0 %904
    %v907 = vmul.f32 %v886, %v905
    %909 = vrot.lane.b32.xlu0 %v907, 32
    %v910 = vpop.permute.xlu0 %909
    %912 = vst.msk [vmem:[#allocation2] sm:$0x30] %vm286, %v910
    %913 = vst [vmem:[#allocation1] sm:$0xff] %v907
    %s914 = scalar_lea.vmem [#allocation1], 4
    %v915 = vld [vmem:[%s914] ss:$9 sm:$0xff]
    %s916 = scalar_lea.vmem [#allocation1], 5
    %v917 = vld [vmem:[%s916] ss:$9 sm:$0xff]
    %v918 = vperm.slane %v915, 0
    %v919 = vperm.slane %v917, 0
    %920 = vrot.lane.b32.xlu0 %v918, 32
    %v921 = vpop.permute.xlu0 %920
    %922 = vrot.lane.b32.xlu0 %v919, 32
    %v923 = vpop.permute.xlu0 %922
    %926 = vst.msk [vmem:[#allocation3 + $0x2] sm:$0x1] %vm756, %v921
    %927 = vst.msk [vmem:[#allocation3 + $0xa] sm:$0x1] %vm756, %v923
    %v928 = vpack.c.bf16 %v907, %v907
    %v930 = vrot.slane %v928, 2
    %931 = vrot.lane.b32.xlu0 %v930, 32
    %v932 = vpop.permute.xlu0 %931
    %v934 = vsel %vm86, %v932, 0
    %936 = vmatpush.bf16.msra.mxu0 0
    %937 = vmatpush.bf16.msra.mxu0 0
    %938 = vmatpush.bf16.msra.mxu0 0
    %939 = vmatpush.bf16.msra.mxu0 0
    %940 = vmatpush.bf16.msra.mxu0 0
    %941 = vmatpush.bf16.msra.mxu0 0
    %942 = vmatpush.bf16.msra.mxu0 %v688
    %943 = vmatpush.bf16.msra.mxu0 %v687
    %944 = vmatmul.bf16.gmra.mxu0 %v934
    %v945 = vpop.f32.mrf.mxu0
    %v946 = vadd.f32 0.0, %v945
    %v947 = vpop.f32.mrf.mxu0
    %948 = vdwg.mxu0
    %v950 = vrot.slane %v946, 2
    %v952 = vadd.f32 %v675, %v950
    %v953 = vxor.u32 %v952, 2147483648
    %v954 = vmul.f32 %v953, 1.442695
    %v955 = vpow.pop %v954
    %v956 = vadd.f32 %v955, 1.0
    %v957 = vrcp.pop %v956
    %v958 = vmul.f32 %v956, %v957
    %v959 = vsub.f32 1.0, %v958
    %v960 = vmul.f32 %v957, %v959
    %v961 = vadd.f32 %v957, %v960
    %vm962 = vweird.f32 %v956
    %vm963 = vweird.f32 %v957
    %vm964 = vmor %vm962, %vm963
    %v965 = vsel %vm964, %v957, %v961
    %v966 = vand.u32 2147483647, %v956
    %vm967 = vcmp.eq.f32.partialorder %v966, 8.507059e+37
    %v968 = vand.u32 %v956, 2147483648
    %v969 = vor.u32 1.1754944e-38, %v968
    %v970 = vsel %vm967, %v969, %v965
    %v971 = vmul.f32 1.0, %v970
    %v972 = vtanh.pop %v952
    %v974 = vrot.slane %v901, 6
    %v976 = vmul.f32 %v971, %v974
    %978 = vrot.lane.b32.xlu0 %v972, 64
    %v979 = vpop.permute.xlu0 %978
    %v981 = vmul.f32 %v971, %v979
    %983 = vrot.lane.b32.xlu0 %v981, 32
    %v984 = vpop.permute.xlu0 %983
    %v986 = vadd.f32 %v976, %v984
    %v987 = vtanh.pop %v986
    %989 = vrot.lane.b32.xlu0 %v987, 64
    %v990 = vpop.permute.xlu0 %989
    %v992 = vmul.f32 %v971, %v990
    %994 = vrot.lane.b32.xlu0 %v992, 32
    %v995 = vpop.permute.xlu0 %994
    %997 = vst.msk [vmem:[#allocation2] sm:$0xc0] %vm357, %v995
    %998 = vst [vmem:[#allocation1] sm:$0xff] %v992
    %s999 = scalar_lea.vmem [#allocation1], 6
    %v1000 = vld [vmem:[%s999] ss:$9 sm:$0xff]
    %s1001 = scalar_lea.vmem [#allocation1], 7
    %v1002 = vld [vmem:[%s1001] ss:$9 sm:$0xff]
    %v1003 = vperm.slane %v1000, 0
    %v1004 = vperm.slane %v1002, 0
    %1005 = vrot.lane.b32.xlu0 %v1003, 32
    %v1006 = vpop.permute.xlu0 %1005
    %1007 = vrot.lane.b32.xlu0 %v1004, 32
    %v1008 = vpop.permute.xlu0 %1007
    %1011 = vst.msk [vmem:[#allocation3 + $0x3] sm:$0x1] %vm756, %v1006
    %1012 = vst.msk [vmem:[#allocation3 + $0xb] sm:$0x1] %vm756, %v1008
    %v1013 = vpack.c.bf16 %v992, %v992
    %v1015 = vrot.slane %v1013, 3
    %1016 = vrot.lane.b32.xlu0 %v1015, 32
    %v1017 = vpop.permute.xlu0 %1016
    %v1019 = vsel %vm86, %v1017, 0
    %1021 = vmatpush.bf16.msra.mxu0 0
    %1022 = vmatpush.bf16.msra.mxu0 0
    %1023 = vmatpush.bf16.msra.mxu0 0
    %1024 = vmatpush.bf16.msra.mxu0 0
    %1025 = vmatpush.bf16.msra.mxu0 0
    %1026 = vmatpush.bf16.msra.mxu0 0
    %1027 = vmatpush.bf16.msra.mxu0 %v688
    %1028 = vmatpush.bf16.msra.mxu0 %v687
    %1029 = vmatmul.bf16.gmra.mxu0 %v1019
    %v1030 = vpop.f32.mrf.mxu0
    %v1031 = vadd.f32 0.0, %v1030
    %v1032 = vpop.f32.mrf.mxu0
    %1033 = vdwg.mxu0
    %v1034 = vadd.f32 %v677, %v1031
    %v1035 = vxor.u32 %v1034, 2147483648
    %v1036 = vmul.f32 %v1035, 1.442695
    %v1037 = vpow.pop %v1036
    %v1038 = vadd.f32 %v1037, 1.0
    %v1039 = vrcp.pop %v1038
    %v1040 = vmul.f32 %v1038, %v1039
    %v1041 = vsub.f32 1.0, %v1040
    %v1042 = vmul.f32 %v1039, %v1041
    %v1043 = vadd.f32 %v1039, %v1042
    %vm1044 = vweird.f32 %v1038
    %vm1045 = vweird.f32 %v1039
    %vm1046 = vmor %vm1044, %vm1045
    %v1047 = vsel %vm1046, %v1039, %v1043
    %v1048 = vand.u32 2147483647, %v1038
    %vm1049 = vcmp.eq.f32.partialorder %v1048, 8.507059e+37
    %v1050 = vand.u32 %v1038, 2147483648
    %v1051 = vor.u32 1.1754944e-38, %v1050
    %v1052 = vsel %vm1049, %v1051, %v1047
    %v1053 = vmul.f32 1.0, %v1052
    %v1054 = vtanh.pop %v1034
    %v1056 = vrot.slane %v986, 6
    %v1058 = vmul.f32 %v1053, %v1056
    %1060 = vrot.lane.b32.xlu0 %v1054, 64
    %v1061 = vpop.permute.xlu0 %1060
    %v1063 = vmul.f32 %v1053, %v1061
    %1065 = vrot.lane.b32.xlu0 %v1063, 32
    %v1066 = vpop.permute.xlu0 %1065
    %v1068 = vadd.f32 %v1058, %v1066
    %v1069 = vtanh.pop %v1068
    %1071 = vrot.lane.b32.xlu0 %v1069, 64
    %v1072 = vpop.permute.xlu0 %1071
    %v1074 = vmul.f32 %v1053, %v1072
    %1076 = vrot.lane.b32.xlu0 %v1074, 32
    %v1077 = vpop.permute.xlu0 %1076
    %1079 = vst.msk [vmem:[#allocation2 + $0x8] sm:$0x3] %vm145, %v1077
    %v1080 = vrot.slane %v1074, 1
    %v1081 = vperm.slane %v1074, 0
    %v1082 = vperm.slane %v1080, 0
    %1083 = vrot.lane.b32.xlu0 %v1081, 32
    %v1084 = vpop.permute.xlu0 %1083
    %1085 = vrot.lane.b32.xlu0 %v1082, 32
    %v1086 = vpop.permute.xlu0 %1085
    %1089 = vst.msk [vmem:[#allocation3 + $0x4] sm:$0x1] %vm756, %v1084
    %1090 = vst.msk [vmem:[#allocation3 + $0xc] sm:$0x1] %vm756, %v1086
    %v1091 = vpack.c.bf16 %v1074, %v1074
    %1093 = vrot.lane.b32.xlu0 %v1091, 32
    %v1094 = vpop.permute.xlu0 %1093
    %v1096 = vsel %vm86, %v1094, 0
    %1098 = vmatpush.bf16.msra.mxu0 0
    %1099 = vmatpush.bf16.msra.mxu0 0
    %1100 = vmatpush.bf16.msra.mxu0 0
    %1101 = vmatpush.bf16.msra.mxu0 0
    %1102 = vmatpush.bf16.msra.mxu0 0
    %1103 = vmatpush.bf16.msra.mxu0 0
    %1104 = vmatpush.bf16.msra.mxu0 %v688
    %1105 = vmatpush.bf16.msra.mxu0 %v687
    %1106 = vmatmul.bf16.gmra.mxu0 %v1096
    %v1107 = vpop.f32.mrf.mxu0
    %v1108 = vadd.f32 0.0, %v1107
    %v1109 = vpop.f32.mrf.mxu0
    %1110 = vdwg.mxu0
    %v1112 = vrot.slane %v1108, 6
    %v1114 = vadd.f32 %v677, %v1112
    %v1115 = vxor.u32 %v1114, 2147483648
    %v1116 = vmul.f32 %v1115, 1.442695
    %v1117 = vpow.pop %v1116
    %v1118 = vadd.f32 %v1117, 1.0
    %v1119 = vrcp.pop %v1118
    %v1120 = vmul.f32 %v1118, %v1119
    %v1121 = vsub.f32 1.0, %v1120
    %v1122 = vmul.f32 %v1119, %v1121
    %v1123 = vadd.f32 %v1119, %v1122
    %vm1124 = vweird.f32 %v1118
    %vm1125 = vweird.f32 %v1119
    %vm1126 = vmor %vm1124, %vm1125
    %v1127 = vsel %vm1126, %v1119, %v1123
    %v1128 = vand.u32 2147483647, %v1118
    %vm1129 = vcmp.eq.f32.partialorder %v1128, 8.507059e+37
    %v1130 = vand.u32 %v1118, 2147483648
    %v1131 = vor.u32 1.1754944e-38, %v1130
    %v1132 = vsel %vm1129, %v1131, %v1127
    %v1133 = vmul.f32 1.0, %v1132
    %v1134 = vtanh.pop %v1114
    %v1136 = vrot.slane %v1068, 6
    %v1138 = vmul.f32 %v1133, %v1136
    %1140 = vrot.lane.b32.xlu0 %v1134, 64
    %v1141 = vpop.permute.xlu0 %1140
    %v1143 = vmul.f32 %v1133, %v1141
    %1145 = vrot.lane.b32.xlu0 %v1143, 32
    %v1146 = vpop.permute.xlu0 %1145
    %v1148 = vadd.f32 %v1138, %v1146
    %v1149 = vtanh.pop %v1148
    %1151 = vrot.lane.b32.xlu0 %v1149, 64
    %v1152 = vpop.permute.xlu0 %1151
    %v1154 = vmul.f32 %v1133, %v1152
    %1156 = vrot.lane.b32.xlu0 %v1154, 32
    %v1157 = vpop.permute.xlu0 %1156
    %1159 = vst.msk [vmem:[#allocation2 + $0x8] sm:$0xc] %vm215, %v1157
    %1160 = vst [vmem:[#allocation1] sm:$0xff] %v1154
    %s1161 = scalar_lea.vmem [#allocation1], 2
    %v1162 = vld [vmem:[%s1161] ss:$9 sm:$0xff]
    %s1163 = scalar_lea.vmem [#allocation1], 3
    %v1164 = vld [vmem:[%s1163] ss:$9 sm:$0xff]
    %v1165 = vperm.slane %v1162, 0
    %v1166 = vperm.slane %v1164, 0
    %1167 = vrot.lane.b32.xlu0 %v1165, 32
    %v1168 = vpop.permute.xlu0 %1167
    %1169 = vrot.lane.b32.xlu0 %v1166, 32
    %v1170 = vpop.permute.xlu0 %1169
    %1173 = vst.msk [vmem:[#allocation3 + $0x5] sm:$0x1] %vm756, %v1168
    %1174 = vst.msk [vmem:[#allocation3 + $0xd] sm:$0x1] %vm756, %v1170
    %v1175 = vpack.c.bf16 %v1154, %v1154
    %v1177 = vrot.slane %v1175, 1
    %1178 = vrot.lane.b32.xlu0 %v1177, 32
    %v1179 = vpop.permute.xlu0 %1178
    %v1181 = vsel %vm86, %v1179, 0
    %1183 = vmatpush.bf16.msra.mxu0 0
    %1184 = vmatpush.bf16.msra.mxu0 0
    %1185 = vmatpush.bf16.msra.mxu0 0
    %1186 = vmatpush.bf16.msra.mxu0 0
    %1187 = vmatpush.bf16.msra.mxu0 0
    %1188 = vmatpush.bf16.msra.mxu0 0
    %1189 = vmatpush.bf16.msra.mxu0 %v688
    %1190 = vmatpush.bf16.msra.mxu0 %v687
    %1191 = vmatmul.bf16.gmra.mxu0 %v1181
    %v1192 = vpop.f32.mrf.mxu0
    %v1193 = vadd.f32 0.0, %v1192
    %v1194 = vpop.f32.mrf.mxu0
    %1195 = vdwg.mxu0
    %v1197 = vrot.slane %v1193, 4
    %v1199 = vadd.f32 %v677, %v1197
    %v1200 = vxor.u32 %v1199, 2147483648
    %v1201 = vmul.f32 %v1200, 1.442695
    %v1202 = vpow.pop %v1201
    %v1203 = vadd.f32 %v1202, 1.0
    %v1204 = vrcp.pop %v1203
    %v1205 = vmul.f32 %v1203, %v1204
    %v1206 = vsub.f32 1.0, %v1205
    %v1207 = vmul.f32 %v1204, %v1206
    %v1208 = vadd.f32 %v1204, %v1207
    %vm1209 = vweird.f32 %v1203
    %vm1210 = vweird.f32 %v1204
    %vm1211 = vmor %vm1209, %vm1210
    %v1212 = vsel %vm1211, %v1204, %v1208
    %v1213 = vand.u32 2147483647, %v1203
    %vm1214 = vcmp.eq.f32.partialorder %v1213, 8.507059e+37
    %v1215 = vand.u32 %v1203, 2147483648
    %v1216 = vor.u32 1.1754944e-38, %v1215
    %v1217 = vsel %vm1214, %v1216, %v1212
    %v1218 = vmul.f32 1.0, %v1217
    %v1219 = vtanh.pop %v1199
    %v1221 = vrot.slane %v1148, 6
    %v1223 = vmul.f32 %v1218, %v1221
    %1225 = vrot.lane.b32.xlu0 %v1219, 64
    %v1226 = vpop.permute.xlu0 %1225
    %v1228 = vmul.f32 %v1218, %v1226
    %1230 = vrot.lane.b32.xlu0 %v1228, 32
    %v1231 = vpop.permute.xlu0 %1230
    %v1233 = vadd.f32 %v1223, %v1231
    %v1234 = vtanh.pop %v1233
    %1236 = vrot.lane.b32.xlu0 %v1234, 64
    %v1237 = vpop.permute.xlu0 %1236
    %v1239 = vmul.f32 %v1218, %v1237
    %1241 = vrot.lane.b32.xlu0 %v1239, 32
    %v1242 = vpop.permute.xlu0 %1241
    %1244 = vst.msk [vmem:[#allocation2 + $0x8] sm:$0x30] %vm286, %v1242
    %1245 = vst [vmem:[#allocation1] sm:$0xff] %v1239
    %s1246 = scalar_lea.vmem [#allocation1], 4
    %v1247 = vld [vmem:[%s1246] ss:$9 sm:$0xff]
    %s1248 = scalar_lea.vmem [#allocation1], 5
    %v1249 = vld [vmem:[%s1248] ss:$9 sm:$0xff]
    %v1250 = vperm.slane %v1247, 0
    %v1251 = vperm.slane %v1249, 0
    %1252 = vrot.lane.b32.xlu0 %v1250, 32
    %v1253 = vpop.permute.xlu0 %1252
    %1254 = vrot.lane.b32.xlu0 %v1251, 32
    %v1255 = vpop.permute.xlu0 %1254
    %1258 = vst.msk [vmem:[#allocation3 + $0x6] sm:$0x1] %vm756, %v1253
    %1259 = vst.msk [vmem:[#allocation3 + $0xe] sm:$0x1] %vm756, %v1255
    %v1260 = vpack.c.bf16 %v1239, %v1239
    %v1262 = vrot.slane %v1260, 2
    %1263 = vrot.lane.b32.xlu0 %v1262, 32
    %v1264 = vpop.permute.xlu0 %1263
    %v1266 = vsel %vm86, %v1264, 0
    %1268 = vmatpush.bf16.msra.mxu0 0
    %1269 = vmatpush.bf16.msra.mxu0 0
    %1270 = vmatpush.bf16.msra.mxu0 0
    %1271 = vmatpush.bf16.msra.mxu0 0
    %1272 = vmatpush.bf16.msra.mxu0 0
    %1273 = vmatpush.bf16.msra.mxu0 0
    %1274 = vmatpush.bf16.msra.mxu0 %v688
    %1275 = vmatpush.bf16.msra.mxu0 %v687
    %1276 = vmatmul.bf16.gmra.mxu0 %v1266
    %v1277 = vpop.f32.mrf.mxu0
    %v1278 = vadd.f32 0.0, %v1277
    %v1279 = vpop.f32.mrf.mxu0
    %1280 = vdwg.mxu0
    %v1282 = vrot.slane %v1278, 2
    %v1284 = vadd.f32 %v677, %v1282
    %v1285 = vxor.u32 %v1284, 2147483648
    %v1286 = vmul.f32 %v1285, 1.442695
    %v1287 = vpow.pop %v1286
    %v1288 = vadd.f32 %v1287, 1.0
    %v1289 = vrcp.pop %v1288
    %v1290 = vmul.f32 %v1288, %v1289
    %v1291 = vsub.f32 1.0, %v1290
    %v1292 = vmul.f32 %v1289, %v1291
    %v1293 = vadd.f32 %v1289, %v1292
    %vm1294 = vweird.f32 %v1288
    %vm1295 = vweird.f32 %v1289
    %vm1296 = vmor %vm1294, %vm1295
    %v1297 = vsel %vm1296, %v1289, %v1293
    %v1298 = vand.u32 2147483647, %v1288
    %vm1299 = vcmp.eq.f32.partialorder %v1298, 8.507059e+37
    %v1300 = vand.u32 %v1288, 2147483648
    %v1301 = vor.u32 1.1754944e-38, %v1300
    %v1302 = vsel %vm1299, %v1301, %v1297
    %v1303 = vmul.f32 1.0, %v1302
    %v1304 = vtanh.pop %v1284
    %v1306 = vrot.slane %v1233, 6
    %v1308 = vmul.f32 %v1303, %v1306
    %1310 = vrot.lane.b32.xlu0 %v1304, 64
    %v1311 = vpop.permute.xlu0 %1310
    %v1313 = vmul.f32 %v1303, %v1311
    %1315 = vrot.lane.b32.xlu0 %v1313, 32
    %v1316 = vpop.permute.xlu0 %1315
    %v1318 = vadd.f32 %v1308, %v1316
    %v1319 = vtanh.pop %v1318
    %1321 = vrot.lane.b32.xlu0 %v1319, 64
    %v1322 = vpop.permute.xlu0 %1321
    %v1324 = vmul.f32 %v1303, %v1322
    %1326 = vrot.lane.b32.xlu0 %v1324, 32
    %v1327 = vpop.permute.xlu0 %1326
    %1329 = vst.msk [vmem:[#allocation2 + $0x8] sm:$0xc0] %vm357, %v1327
    %1330 = vst [vmem:[#allocation1] sm:$0xff] %v1324
    %s1331 = scalar_lea.vmem [#allocation1], 6
    %v1332 = vld [vmem:[%s1331] ss:$9 sm:$0xff]
    %s1333 = scalar_lea.vmem [#allocation1], 7
    %v1334 = vld [vmem:[%s1333] ss:$9 sm:$0xff]
    %v1335 = vperm.slane %v1332, 0
    %v1336 = vperm.slane %v1334, 0
    %1337 = vrot.lane.b32.xlu0 %v1335, 32
    %v1338 = vpop.permute.xlu0 %1337
    %1339 = vrot.lane.b32.xlu0 %v1336, 32
    %v1340 = vpop.permute.xlu0 %1339
    %1343 = vst.msk [vmem:[#allocation3 + $0x7] sm:$0x1] %vm756, %v1338
    %1344 = vst.msk [vmem:[#allocation3 + $0xf] sm:$0x1] %vm756, %v1340
    %v1345 = vld [vmem:[#allocation2] sm:$0xff]
    %v1346 = vld [vmem:[#allocation2 + $0x8] sm:$0xff]
    %v1347 = vpack.c.bf16 %v1346, %v1345
    %v1348 = vld [vmem:[%s7] sm:$0xf]
    %v1349 = vld [vmem:[%s7 + $0x4] sm:$0xf]
    %v1350 = vld [vmem:[%s7 + $0x8] sm:$0xf]
    %v1351 = vld [vmem:[%s7 + $0xc] sm:$0xf]
    %v1352 = vld [vmem:[%s8] sm:$0x1]
    %v1354 = vperm.slane %v1352, 0
    %v1360 = vunpack.c.l.b16 %v1348
    %v1361 = vunpack.c.l.b16 %v1349
    %v1362 = vunpack.c.l.b16 %v1350
    %v1363 = vunpack.c.l.b16 %v1351
    %v1364 = vpack.c.b16 %v1361, %v1360
    %v1365 = vpack.c.b16 %v1363, %v1362
    %v1369 = vsel %vm86, %v1347, 0
    %1371 = vmatpush.bf16.msra.mxu0 0
    %1372 = vmatpush.bf16.msra.mxu0 0
    %1373 = vmatpush.bf16.msra.mxu0 0
    %1374 = vmatpush.bf16.msra.mxu0 0
    %1375 = vmatpush.bf16.msra.mxu0 0
    %1376 = vmatpush.bf16.msra.mxu0 0
    %1377 = vmatpush.bf16.msra.mxu0 %v1365
    %1378 = vmatpush.bf16.msra.mxu0 %v1364
    %1379 = vmatmul.bf16.gmra.mxu0 %v1369
    %v1380 = vpop.f32.mrf.mxu0
    %v1381 = vadd.f32 %v1354, %v1380
    %v1382 = vpop.f32.mrf.mxu0
    %v1383 = vadd.f32 %v1354, %v1382
    %1384 = vdwg.mxu0
    %v1386 = vrot.slane %v1381, 1
    %vm1388 = vcmask 57344
    %1389 = vst.msk [vmem:[#allocation5] sm:$0x1] %vm1388, %v1381
    %1390 = vst.msk [vmem:[#allocation5 + $0x8] sm:$0x1] %vm1388, %v1386
    %1391 = vst [vmem:[#allocation1] sm:$0xff] %v1381
    %s1392 = scalar_lea.vmem [#allocation1], 2
    %v1393 = vld [vmem:[%s1392] ss:$9 sm:$0xff]
    %s1394 = scalar_lea.vmem [#allocation1], 3
    %v1395 = vld [vmem:[%s1394] ss:$9 sm:$0xff]
    %1398 = vst.msk [vmem:[#allocation5 + $0x1] sm:$0x1] %vm1388, %v1393
    %1399 = vst.msk [vmem:[#allocation5 + $0x9] sm:$0x1] %vm1388, %v1395
    %1400 = vst [vmem:[#allocation1] sm:$0xff] %v1381
    %s1401 = scalar_lea.vmem [#allocation1], 4
    %v1402 = vld [vmem:[%s1401] ss:$9 sm:$0xff]
    %s1403 = scalar_lea.vmem [#allocation1], 5
    %v1404 = vld [vmem:[%s1403] ss:$9 sm:$0xff]
    %1407 = vst.msk [vmem:[#allocation5 + $0x2] sm:$0x1] %vm1388, %v1402
    %1408 = vst.msk [vmem:[#allocation5 + $0xa] sm:$0x1] %vm1388, %v1404
    %1409 = vst [vmem:[#allocation1] sm:$0xff] %v1381
    %s1410 = scalar_lea.vmem [#allocation1], 6
    %v1411 = vld [vmem:[%s1410] ss:$9 sm:$0xff]
    %s1412 = scalar_lea.vmem [#allocation1], 7
    %v1413 = vld [vmem:[%s1412] ss:$9 sm:$0xff]
    %1416 = vst.msk [vmem:[#allocation5 + $0x3] sm:$0x1] %vm1388, %v1411
    %1417 = vst.msk [vmem:[#allocation5 + $0xb] sm:$0x1] %vm1388, %v1413
    %v1419 = vrot.slane %v1383, 1
    %1421 = vst.msk [vmem:[#allocation5 + $0x4] sm:$0x1] %vm1388, %v1383
    %1422 = vst.msk [vmem:[#allocation5 + $0xc] sm:$0x1] %vm1388, %v1419
    %1423 = vst [vmem:[#allocation1] sm:$0xff] %v1383
    %s1424 = scalar_lea.vmem [#allocation1], 2
    %v1425 = vld [vmem:[%s1424] ss:$9 sm:$0xff]
    %s1426 = scalar_lea.vmem [#allocation1], 3
    %v1427 = vld [vmem:[%s1426] ss:$9 sm:$0xff]
    %1430 = vst.msk [vmem:[#allocation5 + $0x5] sm:$0x1] %vm1388, %v1425
    %1431 = vst.msk [vmem:[#allocation5 + $0xd] sm:$0x1] %vm1388, %v1427
    %1432 = vst [vmem:[#allocation1] sm:$0xff] %v1383
    %s1433 = scalar_lea.vmem [#allocation1], 4
    %v1434 = vld [vmem:[%s1433] ss:$9 sm:$0xff]
    %s1435 = scalar_lea.vmem [#allocation1], 5
    %v1436 = vld [vmem:[%s1435] ss:$9 sm:$0xff]
    %1439 = vst.msk [vmem:[#allocation5 + $0x6] sm:$0x1] %vm1388, %v1434
    %1440 = vst.msk [vmem:[#allocation5 + $0xe] sm:$0x1] %vm1388, %v1436
    %1441 = vst [vmem:[#allocation1] sm:$0xff] %v1383
    %s1442 = scalar_lea.vmem [#allocation1], 6
    %v1443 = vld [vmem:[%s1442] ss:$9 sm:$0xff]
    %s1444 = scalar_lea.vmem [#allocation1], 7
    %v1445 = vld [vmem:[%s1444] ss:$9 sm:$0xff]
    %1448 = vst.msk [vmem:[#allocation5 + $0x7] sm:$0x1] %vm1388, %v1443
    %1449 = vst.msk [vmem:[#allocation5 + $0xf] sm:$0x1] %vm1388, %v1445
    // Predicated region
    $region38: #{lstm_classifier_all_times.1} parent=1 // pred_check
      _
    $region39: #{lstm_classifier_all_times.1} parent=1 // pred_check_branch
      %1451 = sbr.rel (0) target = $region41
    $region40: #{lstm_classifier_all_times.1} parent=1 // pred_region
      %1453 = vsyncadd [#allocation4], 0
      %s1454 = sshll.u32 [#allocation3], 4
      %s1455 = int_to_ptr.vmem [resolvable:$true] %s1454
      %s1456 = sshll.u32 %s9, 4
      %s1457 = int_to_ptr.hbm [resolvable:$true] %s1456
      %1462 = dma.vmem_to_hbm [thread:$0]  %s1455, 256, %s1457, [#allocation4], 128, 128, 8
    $region41: #{lstm_classifier_all_times.1} parent=1 // pred_fallthru
      _
    // Predicated region
    $region42: #{lstm_classifier_all_times.1} parent=1 // pred_check
      _
    $region43: #{lstm_classifier_all_times.1} parent=1 // pred_check_branch
      %1464 = sbr.rel (0) target = $region45
    $region44: #{lstm_classifier_all_times.1} parent=1 // pred_region
      %1466 = vsyncadd [#allocation6], 0
      %s1467 = sshll.u32 [#allocation5], 4
      %s1468 = int_to_ptr.vmem [resolvable:$true] %s1467
      %s1469 = sshll.u32 %s10, 4
      %s1470 = int_to_ptr.hbm [resolvable:$true] %s1469
      %1475 = dma.vmem_to_hbm [thread:$0]  %s1468, 256, %s1470, [#allocation6], 128, 128, 8
    $region45: #{lstm_classifier_all_times.1} parent=1 // pred_fallthru
      _
    // Predicated region
    $region46: #{lstm_classifier_all_times.1} parent=1 // pred_check
      _
    $region47: #{lstm_classifier_all_times.1} parent=1 // pred_check_branch
      %1477 = sbr.rel (0) target = $region49
    $region48: #{lstm_classifier_all_times.1} parent=1 // pred_region
      %1479 = dma.done [#allocation4], 256
    $region49: #{lstm_classifier_all_times.1} parent=1 // pred_fallthru
      _
    // Predicated region
    $region50: #{lstm_classifier_all_times.1} parent=1 // pred_check
      _
    $region51: #{lstm_classifier_all_times.1} parent=1 // pred_check_branch
      %1481 = sbr.rel (0) target = $region53
    $region52: #{lstm_classifier_all_times.1} parent=1 // pred_region
      %1483 = dma.done [#allocation6], 256
    $region53: #{lstm_classifier_all_times.1} parent=1 // pred_fallthru
      _
    %1484 = vsyncpa [#allocation4], 1
    %1485 = vsyncpa [#allocation6], 1

</llo_original>
